<compile_context>
chip_gen: v7x
topology: tpu7x:2x2x1
jax: 0.10.0
libtpu: 0.0.40
codegen_flags: <defaults>
</compile_context>

<pallas_src>
import functools

import jax
import jax.numpy as jnp
from jax.experimental import pallas as pl
from jax.experimental.pallas import tpu as pltpu

EPS = 1e-5
K_VOL = 27          # 3x3x3 kernel
PAD_QUANTUM = 256   # pad N to this quantum, not to a full max-size tile


def _ceil_div(a, b):
    return -(-a // b)


@functools.lru_cache(maxsize=None)
def _vmem_limit_bytes():
    """Generation-aware scoped-VMEM budget: ~60% of capacity, capped at 96 MiB.

    v7x (64 MiB physical/TC) -> ~38 MiB; v5e/v6e (128 MiB) -> ~77 MiB; falls back to
    32 MiB if the hardware query is unavailable.
    """
    default = 32 * 1024 * 1024
    try:
        cap = int(pltpu.get_tpu_info().vmem_capacity_bytes)
    except Exception:
        return default
    return max(default, min(cap * 6 // 10, 96 * 1024 * 1024))


def _choose_point_tiling(n, *, quantum=PAD_QUANTUM, max_tile=2048, target_tiles=8):
    """Pick (n_pad, tile_n).

    tile_n aims for ~target_tiles grid steps (enough for v7x's two TensorCores to
    split the 'parallel' axis), is a multiple of `quantum`, and is capped at
    `max_tile`. N is padded only up to a multiple of tile_n, so small/medium N never
    pays for a full 2048-row dead tile of gathered-col DMA + GEMM work.
    """
    n_q = _ceil_div(n, quantum) * quantum
    tile = (n_q // target_tiles) // quantum * quantum
    tile = min(max_tile, max(quantum, tile))
    n_pad = _ceil_div(n, tile) * tile
    return n_pad, tile


def _divisor_tile(total, *, max_tile=2048, align=8, target_tiles=4):
    """Largest multiple of `align` dividing `total` and <= max_tile; prefers leaving
    at least `target_tiles` grid steps when possible."""
    cap = min(max_tile, total)
    best_any = None
    best_tgt = None
    for t in range(align, cap + 1, align):
        if total % t:
            continue
        best_any = t
        if total // t >= target_tiles:
            best_tgt = t
    return best_tgt or best_any or align


# ---------------------------------------------------------------------------
# Pallas kernel 1: tiled bf16 GEMM (im2col @ W) + per-tile BN partial stats
# ---------------------------------------------------------------------------
def _conv_stats_kernel(col_ref, w_ref, y_ref, stats_ref):
    # col_ref:   (TILE_N, 27*C_in)  bf16 gathered neighbor features
    # w_ref:     (27*C_in, C_out)   bf16 weights (resident, constant index_map)
    # y_ref:     (TILE_N, C_out)    bf16 conv output tile (stats taken in f32 first)
    # stats_ref: (8, C_out)         f32; row 0 = partial sum, row 1 = partial sumsq
    y = jnp.dot(col_ref[...], w_ref[...], preferred_element_type=jnp.float32)
    s = jnp.sum(y, axis=0, keepdims=True)           # (1, C) f32
    ss = jnp.sum(y * y, axis=0, keepdims=True)      # (1, C) f32
    y_ref[...] = y.astype(y_ref.dtype)              # bf16 store: halves y HBM traffic
    row = jax.lax.broadcasted_iota(jnp.int32, stats_ref.shape, 0)
    stats_ref[...] = jnp.where(row == 0, s, jnp.where(row == 1, ss, 0.0))


def conv_with_stats(col, w_flat, *, tile_n):
    """col: (N_pad, 27*C_in) bf16, w_flat: (27*C_in, C_out) bf16.

    Returns y (N_pad, C_out) bf16 and per-tile stats (nt*8, C_out) f32."""
    n_pad, kc = col.shape
    c_out = w_flat.shape[1]
    assert n_pad % tile_n == 0 and tile_n % 8 == 0
    nt = n_pad // tile_n
    y, stats = pl.pallas_call(
        _conv_stats_kernel,
        out_shape=(jax.ShapeDtypeStruct((n_pad, c_out), jnp.bfloat16),
                   jax.ShapeDtypeStruct((nt * 8, c_out), jnp.float32)),
        grid=(nt,),
        in_specs=[pl.BlockSpec((tile_n, kc), lambda i: (i, 0)),
                  pl.BlockSpec((kc, c_out), lambda i: (0, 0))],
        out_specs=(pl.BlockSpec((tile_n, c_out), lambda i: (i, 0)),
                   pl.BlockSpec((8, c_out), lambda i: (i, 0))),
        compiler_params=pltpu.CompilerParams(
            dimension_semantics=("parallel",),
            vmem_limit_bytes=_vmem_limit_bytes()),
    )(col, w_flat)
    return y, stats


# ---------------------------------------------------------------------------
# Pallas kernel 2: lane-dense fused affine (BN) [+ residual] + ReLU
# ---------------------------------------------------------------------------
def _bn_relu_kernel(y_ref, scale_ref, shift_ref, o_ref):
    y = y_ref[...].astype(jnp.float32)
    o_ref[...] = jnp.maximum(y * scale_ref[...] + shift_ref[...], 0.0).astype(o_ref.dtype)


def _bn_res_relu_kernel(y_ref, scale_ref, shift_ref, res_ref, o_ref):
    y = y_ref[...].astype(jnp.float32)
    r = res_ref[...].astype(jnp.float32)
    o_ref[...] = jnp.maximum(
        y * scale_ref[...] + shift_ref[...] + r, 0.0).astype(o_ref.dtype)


def bn_relu_packed(y, scale, shift, residual, *, out_dtype,
                   max_tile_rows=2048, target_tiles=4):
    """y: (N_pad, C) bf16; scale/shift: (C,) f32; residual: (N_pad, C) bf16 or None.

    Repacks 128//C consecutive rows into one 128-lane row (free contiguous reshape)
    so every load/store is a full unmasked 128-lane access; the row-tile is chosen
    independently of the GEMM tile and made large (streaming-kernel roofline).
    NOTE: channel counts with C >= 128 or 128 % C != 0 (e.g. 48, 96, 192) fall back
    to pack=1 -> narrower masked stores; a perf cliff, not a correctness issue.
    """
    n_pad, c = y.shape
    pack = 1
    if c < 128 and 128 % c == 0 and (PAD_QUANTUM // (128 // c)) % 8 == 0:
        pack = 128 // c
    width = pack * c
    rows = n_pad // pack
    tile_rows = _divisor_tile(rows, max_tile=max_tile_rows, align=8,
                              target_tiles=target_tiles)

    y_p = y.reshape(rows, width)                                  # free reshape
    scale_row = jnp.tile(scale, pack).reshape(1, width).astype(jnp.float32)
    shift_row = jnp.tile(shift, pack).reshape(1, width).astype(jnp.float32)

    args = [y_p, scale_row, shift_row]
    in_specs = [pl.BlockSpec((tile_rows, width), lambda i: (i, 0)),
                pl.BlockSpec((1, width), lambda i: (0, 0)),
                pl.BlockSpec((1, width), lambda i: (0, 0))]
    if residual is not None:
        args.append(residual.reshape(rows, width))
        in_specs.append(pl.BlockSpec((tile_rows, width), lambda i: (i, 0)))
        kernel = _bn_res_relu_kernel
    else:
        kernel = _bn_relu_kernel     # branch 1: no zero-residual DMA

    out = pl.pallas_call(
        kernel,
        out_shape=jax.ShapeDtypeStruct((rows, width), out_dtype),
        grid=(rows // tile_rows,),
        in_specs=in_specs,
        out_specs=pl.BlockSpec((tile_rows, width), lambda i: (i, 0)),
        compiler_params=pltpu.CompilerParams(
            dimension_semantics=("parallel",),
            vmem_limit_bytes=_vmem_limit_bytes()),
    )(*args)
    return out.reshape(n_pad, c)


# ---------------------------------------------------------------------------
# Glue: neighbor map (sorted-key lookup, O(N log N)) and im2col gather (XLA)
# ---------------------------------------------------------------------------
def build_neighbor_map(coords, dilation=1):
    """coords: (N, 4) int32 [batch, z, y, x]. Returns (N, 27) int32; -1 = missing."""
    coords = coords.astype(jnp.int32)
    offs = [(0, dz * dilation, dy * dilation, dx * dilation)
            for dz in (-1, 0, 1) for dy in (-1, 0, 1) for dx in (-1, 0, 1)]
    offsets = jnp.asarray(offs, dtype=jnp.int32)                     # (27, 4)

    lo = coords.min(axis=0)
    hi = coords.max(axis=0)
    span = hi - lo + 2 * dilation + 1                                # per-dim key range
    shifted = coords - lo + dilation                                 # non-negative

    # Guard against int32 key overflow (only checkable when spans are concrete).
    span_c = None
    try:
        span_c = [int(span[d]) for d in range(4)]
    except Exception:
        pass   # traced under jit: caller must ensure the packed key fits in int32
    if span_c is not None:
        prod = span_c[0] * span_c[1] * span_c[2] * span_c[3]
        if prod >= 2 ** 31:
            raise ValueError("coordinate extent too large for int32 neighbor keys")

    def pack(c):
        k = c[..., 0]
        for d in range(1, 4):
            k = k * span[d] + c[..., d]
        return k

    keys = pack(shifted)                                             # (N,)
    tgt_keys = pack(shifted[:, None, :] + offsets[None, :, :])       # (N, 27)

    order = jnp.argsort(keys)
    sorted_keys = keys[order]
    pos = jnp.clip(jnp.searchsorted(sorted_keys, tgt_keys), 0, keys.shape[0] - 1)
    found = sorted_keys[pos] == tgt_keys
    idx = order[pos].astype(jnp.int32)
    return jnp.where(found, idx, -1)


def im2col_gather(feats, nbr):
    """feats: (M, C) bf16, nbr: (N, 27) -> (N, 27*C); zeros where the neighbor is
    missing. No transpose: (N, 27, C) -> (N, 27*C) is a free contiguous reshape."""
    valid = nbr >= 0
    idx = jnp.where(valid, nbr, 0)
    g = jnp.where(valid[..., None], feats[idx], jnp.zeros((), feats.dtype))  # (N,27,C)
    return g.reshape(nbr.shape[0], -1)                               # (N, 27*C)


def _pad_rows(x, n_pad):
    n = x.shape[0]
    if n == n_pad:
        return x
    return jnp.pad(x, ((0, n_pad - n), (0, 0)))


# ---------------------------------------------------------------------------
# Full MinkResBlock forward
# ---------------------------------------------------------------------------
def mink_res_block(feats, nbr, w1, w2, gamma1, beta1, gamma2, beta2,
                   *, max_tile_n=2048, target_tiles=8):
    n, c_in = feats.shape
    c_out = w1.shape[-1]
    assert c_in == c_out, "residual add requires in_channels == out_channels"
    assert nbr.shape[0] == n
    n_pad, tile_n = _choose_point_tiling(n, max_tile=max_tile_n,
                                         target_tiles=target_tiles)
    nt = n_pad // tile_n

    feats_bf16 = feats.astype(jnp.bfloat16)   # one cast: feeds conv1 gather + residual

    def branch(x_bf16, w, gamma, beta, residual_bf16, out_dtype):
        col = im2col_gather(x_bf16, nbr)                  # (N, 27*C) bf16, no transpose
        col = _pad_rows(col, n_pad)                       # zero rows -> zero conv output
        w_flat = w.reshape(-1, c_out).astype(jnp.bfloat16)
        y, stats = conv_with_stats(col, w_flat, tile_n=tile_n)   # y bf16, stats f32
        # Finalize batch statistics over the TRUE point count (padding contributes 0).
        # NOTE: var = E[y^2] - mean^2 in f32; fine unless |mean| >> std per channel
        # (the clamp guards against tiny negative values from rounding).
        st = stats.reshape(nt, 8, c_out)
        mean = st[:, 0, :].sum(axis=0) / n
        ex2 = st[:, 1, :].sum(axis=0) / n
        var = jnp.maximum(ex2 - mean * mean, 0.0)
        scale = gamma * jax.lax.rsqrt(var + EPS)
        shift = beta - mean * scale
        return bn_relu_packed(y, scale, shift, residual_bf16, out_dtype=out_dtype)

    # Branch 1: ReLU(BN1(Conv1 x)) emitted directly in bf16 (feeds the next gather).
    h = branch(feats_bf16, w1, gamma1, beta1, None, jnp.bfloat16)[:n]
    # Branch 2: ReLU(BN2(Conv2 h) + x), residual streamed in bf16, output f32.
    out = branch(h, w2, gamma2, beta2, _pad_rows(feats_bf16, n_pad), jnp.float32)[:n]
    return out


# ---------------------------------------------------------------------------
# Pure-JAX reference. It mirrors the kernel pipeline's reduced-precision points
# (bf16 conv operands, bf16-stored conv output / residual, f32 BN statistics);
# a full-f32 PyTorch forward differs from this only at bf16 level.
# ---------------------------------------------------------------------------
def _ref_conv(feats_bf16, nbr, w):
    valid = nbr >= 0
    idx = jnp.where(valid, nbr, 0)
    g = jnp.where(valid[..., None], feats_bf16[idx], jnp.bfloat16(0))   # (N, 27, Cin)
    return jnp.einsum("nkc,kcd->nd", g, w.astype(jnp.bfloat16),
                      preferred_element_type=jnp.float32)


def _ref_bn_affine(y, gamma, beta):
    mean = y.mean(0)
    var = jnp.mean(jnp.square(y - mean), 0)
    scale = gamma * jax.lax.rsqrt(var + EPS)
    shift = beta - mean * scale
    return scale, shift


def _ref_block(feats, nbr, w1, w2, g1, b1, g2, b2):
    fb = feats.astype(jnp.bfloat16)
    y1 = _ref_conv(fb, nbr, w1)
    s1, t1 = _ref_bn_affine(y1, g1, b1)
    h = jnp.maximum(y1.astype(jnp.bfloat16).astype(jnp.float32) * s1 + t1, 0.0)
    h = h.astype(jnp.bfloat16)
    y2 = _ref_conv(h, nbr, w2)
    s2, t2 = _ref_bn_affine(y2, g2, b2)
    out = jnp.maximum(y2.astype(jnp.bfloat16).astype(jnp.float32) * s2 + t2
                      + fb.astype(jnp.float32), 0.0)
    return out


if __name__ == "__main__":
    key = jax.random.PRNGKey(0)
    keys = jax.random.split(key, 10)

    C_IN = C_OUT = 32
    BATCH = 2
    PTS_PER_BATCH = 300       # total N = 600 sparse points
    GRID = 12                 # voxel grid extent per spatial dim

    # Deterministic unique sparse voxel coordinates per batch element.
    coords_list = []
    for b in range(BATCH):
        flat = jax.random.permutation(keys[b], GRID ** 3)[:PTS_PER_BATCH]
        z = (flat // (GRID * GRID)).astype(jnp.int32)
        y = ((flat // GRID) % GRID).astype(jnp.int32)
        x = (flat % GRID).astype(jnp.int32)
        bcol = jnp.full((PTS_PER_BATCH,), b, dtype=jnp.int32)
        coords_list.append(jnp.stack([bcol, z, y, x], axis=1))
    coords = jnp.concatenate(coords_list, axis=0)                    # (N, 4)
    N = coords.shape[0]

    feats = jax.random.normal(keys[2], (N, C_IN), jnp.float32)

    # MinkowskiConvolution weight layout: (27, Cin, Cout)
    w1 = jax.random.normal(keys[3], (K_VOL, C_IN, C_OUT), jnp.float32) * 0.1
    w2 = jax.random.normal(keys[4], (K_VOL, C_OUT, C_OUT), jnp.float32) * 0.1
    gamma1 = jax.random.uniform(keys[5], (C_OUT,), jnp.float32, 0.5, 1.5)
    beta1 = jax.random.normal(keys[6], (C_OUT,), jnp.float32) * 0.1
    gamma2 = jax.random.uniform(keys[7], (C_OUT,), jnp.float32, 0.5, 1.5)
    beta2 = jax.random.normal(keys[8], (C_OUT,), jnp.float32) * 0.1

    nbr = build_neighbor_map(coords, dilation=1)                     # (N, 27)

    fwd = jax.jit(mink_res_block)
    out = jax.block_until_ready(fwd(feats, nbr, w1, w2, gamma1, beta1, gamma2, beta2))

    ref = _ref_block(feats, nbr, w1, w2, gamma1, beta1, gamma2, beta2)
    assert out.shape == (N, C_OUT)
    max_err = float(jnp.max(jnp.abs(out - ref)))
    assert jnp.allclose(out, ref, atol=2e-2, rtol=2e-2), (
        f"mismatch vs JAX reference (max abs err {max_err})")

    print("KERNEL_OK")
</pallas_src>

<mosaic_0001>
module attributes {stable_mosaic.version = 11 : i64} {
  func.func @_conv_stats_kernel(%arg0: i32, %arg1: memref<256x864xbf16, #tpu.memory_space<vmem>>, %arg2: memref<864x32xbf16, #tpu.memory_space<vmem>>, %arg3: memref<256x32xbf16, #tpu.memory_space<vmem>>, %arg4: memref<8x32xf32, #tpu.memory_space<vmem>>) attributes {dimension_semantics = [#tpu.dimension_semantics<parallel>], iteration_bounds = array<i64: 3>, scalar_prefetch = 0 : i64, scratch_operands = 0 : i64, tpu.core_type = #tpu.core_type<tc>, window_params = [{transform_indices = @transform_0, window_bounds = array<i64: 256, 864>}, {pipeline_mode = #tpu.pipeline_mode<synchronous>, transform_indices = @transform_1, window_bounds = array<i64: 864, 32>}, {transform_indices = @transform_2, window_bounds = array<i64: 256, 32>}, {transform_indices = @transform_3, window_bounds = array<i64: 8, 32>}]} {
    %c0 = arith.constant 0 : index
    %c0_0 = arith.constant 0 : index
    %0 = vector.load %arg1[%c0, %c0_0] : memref<256x864xbf16, #tpu.memory_space<vmem>>, vector<256x864xbf16>
    %c0_1 = arith.constant 0 : index
    %c0_2 = arith.constant 0 : index
    %1 = vector.load %arg2[%c0_1, %c0_2] : memref<864x32xbf16, #tpu.memory_space<vmem>>, vector<864x32xbf16>
    %cst = arith.constant dense<0.000000e+00> : vector<256x32xf32>
    %2 = tpu.matmul %0, %1, %cst {dimension_numbers = #tpu.dot_dimension_numbers<[1], [0], [0], [1], [0, 0, 1, 1], [], []>} : vector<256x864xbf16>, vector<864x32xbf16>, vector<256x32xf32> -> vector<256x32xf32>
    %cst_3 = arith.constant dense<0.000000e+00> : vector<32xf32>
    %3 = vector.multi_reduction <add>, %2, %cst_3 [0] : vector<256x32xf32> to vector<32xf32>
    %4 = vector.shape_cast %3 : vector<32xf32> to vector<1x32xf32>
    %5 = arith.mulf %2, %2 : vector<256x32xf32>
    %cst_4 = arith.constant dense<0.000000e+00> : vector<32xf32>
    %6 = vector.multi_reduction <add>, %5, %cst_4 [0] : vector<256x32xf32> to vector<32xf32>
    %7 = vector.shape_cast %6 : vector<32xf32> to vector<1x32xf32>
    %8 = arith.truncf %2 : vector<256x32xf32> to vector<256x32xbf16>
    %c0_5 = arith.constant 0 : index
    %c0_6 = arith.constant 0 : index
    %9 = vector.load %arg3[%c0_5, %c0_6] : memref<256x32xbf16, #tpu.memory_space<vmem>>, vector<256x32xbf16>
    tpu.vector_store %arg3[%c0_5, %c0_6], %8 {strides = array<i32>} : memref<256x32xbf16, #tpu.memory_space<vmem>>, vector<256x32xbf16>,
    %10 = tpu.iota {dimensions = array<i32: 0>} : vector<8x32xi32>
    %c0_i32 = arith.constant 0 : i32
    %11 = vector.broadcast %c0_i32 : i32 to vector<8x32xi32>
    %12 = arith.cmpi eq, %10, %11 : vector<8x32xi32>
    %c1_i32 = arith.constant 1 : i32
    %13 = vector.broadcast %c1_i32 : i32 to vector<8x32xi32>
    %14 = arith.cmpi eq, %10, %13 : vector<8x32xi32>
    %cst_7 = arith.constant 0.000000e+00 : f32
    %15 = vector.shape_cast %7 : vector<1x32xf32> to vector<1x32xf32>
    %16 = vector.broadcast %15 : vector<1x32xf32> to vector<8x32xf32>
    %17 = vector.broadcast %cst_7 : f32 to vector<8x32xf32>
    %18 = arith.select %14, %16, %17 : vector<8x32xi1>, vector<8x32xf32>
    %19 = vector.shape_cast %4 : vector<1x32xf32> to vector<1x32xf32>
    %20 = vector.broadcast %19 : vector<1x32xf32> to vector<8x32xf32>
    %21 = arith.select %12, %20, %18 : vector<8x32xi1>, vector<8x32xf32>
    %c0_8 = arith.constant 0 : index
    %c0_9 = arith.constant 0 : index
    %22 = vector.load %arg4[%c0_8, %c0_9] : memref<8x32xf32, #tpu.memory_space<vmem>>, vector<8x32xf32>
    tpu.vector_store %arg4[%c0_8, %c0_9], %21 {strides = array<i32>} : memref<8x32xf32, #tpu.memory_space<vmem>>, vector<8x32xf32>,
    return
  }
  func.func @transform_0(%arg0: i32) -> (i32, i32) {
    %c0_i32 = arith.constant 0 : i32
    %c0_i32_0 = arith.constant 0 : i32
    return %arg0, %c0_i32 : i32, i32
  }
  func.func @transform_1(%arg0: i32) -> (i32, i32) {
    %c0_i32 = arith.constant 0 : i32
    %c0_i32_0 = arith.constant 0 : i32
    %c0_i32_1 = arith.constant 0 : i32
    return %c0_i32, %c0_i32_0 : i32, i32
  }
  func.func @transform_2(%arg0: i32) -> (i32, i32) {
    %c0_i32 = arith.constant 0 : i32
    %c0_i32_0 = arith.constant 0 : i32
    return %arg0, %c0_i32 : i32, i32
  }
  func.func @transform_3(%arg0: i32) -> (i32, i32) {
    %c0_i32 = arith.constant 0 : i32
    %c0_i32_0 = arith.constant 0 : i32
    return %arg0, %c0_i32 : i32, i32
  }
}

module attributes {stable_mosaic.version = 11 : i64} {
  func.func @_bn_relu_kernel(%arg0: i32, %arg1: memref<48x128xbf16, #tpu.memory_space<vmem>>, %arg2: memref<1x128xf32, #tpu.memory_space<vmem>>, %arg3: memref<1x128xf32, #tpu.memory_space<vmem>>, %arg4: memref<48x128xbf16, #tpu.memory_space<vmem>>) attributes {dimension_semantics = [#tpu.dimension_semantics<parallel>], iteration_bounds = array<i64: 4>, scalar_prefetch = 0 : i64, scratch_operands = 0 : i64, tpu.core_type = #tpu.core_type<tc>, window_params = [{transform_indices = @transform_0, window_bounds = array<i64: 48, 128>}, {pipeline_mode = #tpu.pipeline_mode<synchronous>, transform_indices = @transform_1, window_bounds = array<i64: 1, 128>}, {pipeline_mode = #tpu.pipeline_mode<synchronous>, transform_indices = @transform_2, window_bounds = array<i64: 1, 128>}, {transform_indices = @transform_3, window_bounds = array<i64: 48, 128>}]} {
    %c0 = arith.constant 0 : index
    %c0_0 = arith.constant 0 : index
    %0 = vector.load %arg1[%c0, %c0_0] : memref<48x128xbf16, #tpu.memory_space<vmem>>, vector<48x128xbf16>
    %1 = arith.extf %0 : vector<48x128xbf16> to vector<48x128xf32>
    %c0_1 = arith.constant 0 : index
    %c0_2 = arith.constant 0 : index
    %2 = vector.load %arg2[%c0_1, %c0_2] : memref<1x128xf32, #tpu.memory_space<vmem>>, vector<1x128xf32>
    %3 = vector.broadcast %2 : vector<1x128xf32> to vector<48x128xf32>
    %4 = arith.mulf %1, %3 : vector<48x128xf32>
    %c0_3 = arith.constant 0 : index
    %c0_4 = arith.constant 0 : index
    %5 = vector.load %arg3[%c0_3, %c0_4] : memref<1x128xf32, #tpu.memory_space<vmem>>, vector<1x128xf32>
    %6 = vector.broadcast %5 : vector<1x128xf32> to vector<48x128xf32>
    %7 = arith.addf %4, %6 : vector<48x128xf32>
    %cst = arith.constant 0.000000e+00 : f32
    %8 = vector.broadcast %cst : f32 to vector<48x128xf32>
    %9 = arith.maximumf %7, %8 : vector<48x128xf32>
    %10 = arith.truncf %9 : vector<48x128xf32> to vector<48x128xbf16>
    %c0_5 = arith.constant 0 : index
    %c0_6 = arith.constant 0 : index
    %11 = vector.load %arg4[%c0_5, %c0_6] : memref<48x128xbf16, #tpu.memory_space<vmem>>, vector<48x128xbf16>
    tpu.vector_store %arg4[%c0_5, %c0_6], %10 {strides = array<i32>} : memref<48x128xbf16, #tpu.memory_space<vmem>>, vector<48x128xbf16>,
    return
  }
  func.func @transform_0(%arg0: i32) -> (i32, i32) {
    %c0_i32 = arith.constant 0 : i32
    %c0_i32_0 = arith.constant 0 : i32
    return %arg0, %c0_i32 : i32, i32
  }
  func.func @transform_1(%arg0: i32) -> (i32, i32) {
    %c0_i32 = arith.constant 0 : i32
    %c0_i32_0 = arith.constant 0 : i32
    %c0_i32_1 = arith.constant 0 : i32
    return %c0_i32, %c0_i32_0 : i32, i32
  }
  func.func @transform_2(%arg0: i32) -> (i32, i32) {
    %c0_i32 = arith.constant 0 : i32
    %c0_i32_0 = arith.constant 0 : i32
    %c0_i32_1 = arith.constant 0 : i32
    return %c0_i32, %c0_i32_0 : i32, i32
  }
  func.func @transform_3(%arg0: i32) -> (i32, i32) {
    %c0_i32 = arith.constant 0 : i32
    %c0_i32_0 = arith.constant 0 : i32
    return %arg0, %c0_i32 : i32, i32
  }
}

module attributes {stable_mosaic.version = 11 : i64} {
  func.func @_bn_res_relu_kernel(%arg0: i32, %arg1: memref<48x128xbf16, #tpu.memory_space<vmem>>, %arg2: memref<1x128xf32, #tpu.memory_space<vmem>>, %arg3: memref<1x128xf32, #tpu.memory_space<vmem>>, %arg4: memref<48x128xbf16, #tpu.memory_space<vmem>>, %arg5: memref<48x128xf32, #tpu.memory_space<vmem>>) attributes {dimension_semantics = [#tpu.dimension_semantics<parallel>], iteration_bounds = array<i64: 4>, scalar_prefetch = 0 : i64, scratch_operands = 0 : i64, tpu.core_type = #tpu.core_type<tc>, window_params = [{transform_indices = @transform_0, window_bounds = array<i64: 48, 128>}, {pipeline_mode = #tpu.pipeline_mode<synchronous>, transform_indices = @transform_1, window_bounds = array<i64: 1, 128>}, {pipeline_mode = #tpu.pipeline_mode<synchronous>, transform_indices = @transform_2, window_bounds = array<i64: 1, 128>}, {transform_indices = @transform_3, window_bounds = array<i64: 48, 128>}, {transform_indices = @transform_4, window_bounds = array<i64: 48, 128>}]} {
    %c0 = arith.constant 0 : index
    %c0_0 = arith.constant 0 : index
    %0 = vector.load %arg1[%c0, %c0_0] : memref<48x128xbf16, #tpu.memory_space<vmem>>, vector<48x128xbf16>
    %1 = arith.extf %0 : vector<48x128xbf16> to vector<48x128xf32>
    %c0_1 = arith.constant 0 : index
    %c0_2 = arith.constant 0 : index
    %2 = vector.load %arg4[%c0_1, %c0_2] : memref<48x128xbf16, #tpu.memory_space<vmem>>, vector<48x128xbf16>
    %3 = arith.extf %2 : vector<48x128xbf16> to vector<48x128xf32>
    %c0_3 = arith.constant 0 : index
    %c0_4 = arith.constant 0 : index
    %4 = vector.load %arg2[%c0_3, %c0_4] : memref<1x128xf32, #tpu.memory_space<vmem>>, vector<1x128xf32>
    %5 = vector.broadcast %4 : vector<1x128xf32> to vector<48x128xf32>
    %6 = arith.mulf %1, %5 : vector<48x128xf32>
    %c0_5 = arith.constant 0 : index
    %c0_6 = arith.constant 0 : index
    %7 = vector.load %arg3[%c0_5, %c0_6] : memref<1x128xf32, #tpu.memory_space<vmem>>, vector<1x128xf32>
    %8 = vector.broadcast %7 : vector<1x128xf32> to vector<48x128xf32>
    %9 = arith.addf %6, %8 : vector<48x128xf32>
    %10 = arith.addf %9, %3 : vector<48x128xf32>
    %cst = arith.constant 0.000000e+00 : f32
    %11 = vector.broadcast %cst : f32 to vector<48x128xf32>
    %12 = arith.maximumf %10, %11 : vector<48x128xf32>
    %c0_7 = arith.constant 0 : index
    %c0_8 = arith.constant 0 : index
    %13 = vector.load %arg5[%c0_7, %c0_8] : memref<48x128xf32, #tpu.memory_space<vmem>>, vector<48x128xf32>
    tpu.vector_store %arg5[%c0_7, %c0_8], %12 {strides = array<i32>} : memref<48x128xf32, #tpu.memory_space<vmem>>, vector<48x128xf32>,
    return
  }
  func.func @transform_0(%arg0: i32) -> (i32, i32) {
    %c0_i32 = arith.constant 0 : i32
    %c0_i32_0 = arith.constant 0 : i32
    return %arg0, %c0_i32 : i32, i32
  }
  func.func @transform_1(%arg0: i32) -> (i32, i32) {
    %c0_i32 = arith.constant 0 : i32
    %c0_i32_0 = arith.constant 0 : i32
    %c0_i32_1 = arith.constant 0 : i32
    return %c0_i32, %c0_i32_0 : i32, i32
  }
  func.func @transform_2(%arg0: i32) -> (i32, i32) {
    %c0_i32 = arith.constant 0 : i32
    %c0_i32_0 = arith.constant 0 : i32
    %c0_i32_1 = arith.constant 0 : i32
    return %c0_i32, %c0_i32_0 : i32, i32
  }
  func.func @transform_3(%arg0: i32) -> (i32, i32) {
    %c0_i32 = arith.constant 0 : i32
    %c0_i32_0 = arith.constant 0 : i32
    return %arg0, %c0_i32 : i32, i32
  }
  func.func @transform_4(%arg0: i32) -> (i32, i32) {
    %c0_i32 = arith.constant 0 : i32
    %c0_i32_0 = arith.constant 0 : i32
    return %arg0, %c0_i32 : i32, i32
  }
}

</mosaic_0001>

<llo_original>
// kernel: tile.23
$region0: #{tile.23}
  #allocation0 [shape = 's32[1]{0}', space=sflag, size = 0x4, scoped, tag = 'scoped memory for tile.23']
  %s0 = inlined_call_operand.vmem [shape: f32[32], index: 0, kind: input, shape index: {}]
  %s1 = inlined_call_operand.vmem [shape: f32[4,32], index: 1, kind: output, shape index: {}]
  // Predicated region
  $region2: #{tile.23} parent=0 // pred_check
    _
  $region3: #{tile.23} parent=0 // pred_check_branch
    %3 = sbr.rel (0) target = $region5
  $region4: #{tile.23} parent=0 // pred_region
    _
  $region5: #{tile.23} parent=0 // pred_fallthru
    _
  %v4 = vld [vmem:[%s0] ss:$0 sm:$0xff]
  %5 = vst [vmem:[%s1] sm:$0xf] %v4

// kernel: tile.24
$region0: #{tile.24}
  %s0 = inlined_call_operand.vmem [shape: f32[4,32], index: 0, kind: input, shape index: {}]
  %s1 = inlined_call_operand.vmem [shape: f32[1,128], index: 1, kind: output, shape index: {}]
  $region1: #{tile.24} parent=0
    #allocation0 [shape = 'u8[4096]{0}', space=vmem, size = 0x1000, scoped, tag = 'scoped mem for output reshape']
    #allocation1 [shape = 'u8[4096]{0}', space=vmem, size = 0x1000, scoped, tag = 'scoped mem for input reshape']
    %s3 = sshllo.u32 0, 4
    %v4 = vld [vmem:[%s0] sm:%s3]
    %5 = vst [vmem:[#allocation1] sm:%s3] %v4
    %v6 = vld [vmem:[#allocation1] sm:$0x1]
    %vm7 = vcmask 261120
    %8 = vst.msk [vmem:[#allocation0] sm:$0x1] %vm7, %v6
    %s9 = scalar_lea.vmem [#allocation1], 3
    %v10 = vld [vmem:[%s9] sm:$0x1]
    %11 = vrot.lane.b32.xlu0 %v10, 96
    %v12 = vpop.permute.xlu0 %11
    %vm13 = vcmask 1048320
    %14 = vst.msk [vmem:[#allocation0] sm:$0x1] %vm13, %v12
    %s15 = scalar_lea.vmem [#allocation1], 2
    %v16 = vld [vmem:[%s15] sm:$0x1]
    %17 = vrot.lane.b32.xlu0 %v16, 64
    %v18 = vpop.permute.xlu0 %17
    %vm19 = vcmask 785920
    %20 = vst.msk [vmem:[#allocation0] sm:$0x1] %vm19, %v18
    %s21 = scalar_lea.vmem [#allocation1], 1
    %v22 = vld [vmem:[%s21] sm:$0x1]
    %23 = vrot.lane.b32.xlu0 %v22, 32
    %v24 = vpop.permute.xlu0 %23
    %vm25 = vcmask 523520
    %26 = vst.msk [vmem:[#allocation0] sm:$0x1] %vm25, %v24
    %s28 = sshllo.u32 0, 1
    %v30 = vld [vmem:[#allocation0] sm:%s28]
    %s31 = sshllo.u32 0, 1
    %32 = vst [vmem:[%s1] sm:%s31] %v30

// kernel: mink_res_block.4
$region0: #{mink_res_block.4}
  #allocation0 [shape = 'u32[]', space=smem, size = 0x4, offset = 0x4, fixed_abs, tag = 'smem constant byte address 0x4 - core index']
  #allocation1 [shape = 'u32[144,128]{1,0:T(1,128)}', space=vmem, size = 0x12000, scoped, tag = 'internal scratch']
  %s0 = inlined_call_operand.vmem [shape: bf16[768,864], index: 0, kind: input, shape index: {}]
  %s1 = inlined_call_operand.vmem [shape: bf16[864,32], index: 1, kind: input, shape index: {}]
  %s2 = inlined_call_operand.vmem [shape: bf16[768,32], index: 2, kind: output, shape index: {0}]
  %s3 = inlined_call_operand.vmem [shape: f32[24,32], index: 3, kind: output, shape index: {1}]
  %4 = xla_tuple %s2, %s3
  %s5 = sld [smem:[#allocation0]]
  $region49: #{mink_res_block.4} parent=0
    _
  %s7 = ssub.s32 1, %s5
  %s8 = scalar_select 0, %s7, %s5
  loop: start=0, step=1, limit=5
  $region2: #{mink_res_block.4} parent=0 // loop_pre_header
    _
  $region3: #{mink_res_block.4} parent=0 // loop_header
    %s10 = sphi 0, %s14
    %p11 = scmp.ge.s32.totalorder %s10, 5
    %s20 = sphi 0, %s22
    %s23 = sphi 0, %s20
    %s24 = sphi 0, %s23
    %s40 = sphi 0, %s24
    %s44 = sphi 0, %s44
    %s46 = sphi 0, %s44
    %s47 = sphi 0, %s46
    %s61 = sphi 0, %s47
    %s67 = sphi 0, %s69
    %s70 = sphi 0, %s67
    %s71 = sphi 0, %s70
    %s87 = sphi 0, %s71
    %s93 = sphi 0, %s95
    %s96 = sphi 0, %s93
    %s97 = sphi 0, %s96
    %s113 = sphi 0, %s97
  $region4: #{mink_res_block.4} parent=0 // loop_header_branch
    %13 = sbr.rel (%p11) target = $region8
  $region5: #{mink_res_block.4} parent=0 // loop_body
    %s15 = ssub.s32 %s10, 1
    %s16 = ssub.s32 %s10, 2
    %s17 = sadd.s32 %s10, 1
    %s18 = ssub.s32 %s10, %s17
    %p19 = scmp.eq.s32.totalorder %s18, 0
    %s21 = sadd.s32 %s20, 1
    %s22 = scalar_select %p19, %s20, %s21
    %p25 = pneg %p19
    %p26 = scmp.eq.s32.totalorder %s10, 2
    %p27 = por %p25, %p26
    %p28 = scmp.ne.s32.totalorder %s20, %s23
    %p29 = scmp.eq.s32.totalorder %s10, 0
    %p30 = por %p28, %p29
    %p31 = scmp.ne.s32.totalorder %s20, %s23
    %p32 = scmp.eq.s32.totalorder %s15, 2
    %p33 = por %p31, %p32
    %p34 = scmp.ne.s32.totalorder %s23, %s24
    %p35 = scmp.eq.s32.totalorder %s15, 0
    %p36 = por %p34, %p35
    %p37 = scmp.ne.s32.totalorder %s23, %s24
    %p38 = scmp.eq.s32.totalorder %s16, 2
    %p39 = por %p37, %p38
    %p41 = scmp.ne.s32.totalorder %s24, %s40
    %p42 = scmp.eq.s32.totalorder %s16, 0
    %p43 = por %p41, %p42
    %s45 = sadd.s32 %s44, 1
    %p48 = scmp.eq.s32.totalorder %s10, 2
    %p49 = scmp.ne.s32.totalorder %s44, %s46
    %p50 = scmp.eq.s32.totalorder %s10, 0
    %p51 = por %p49, %p50
    %p52 = scmp.ne.s32.totalorder %s44, %s46
    %p53 = scmp.eq.s32.totalorder %s15, 2
    %p54 = por %p52, %p53
    %p55 = scmp.ne.s32.totalorder %s46, %s47
    %p56 = scmp.eq.s32.totalorder %s15, 0
    %p57 = por %p55, %p56
    %p58 = scmp.ne.s32.totalorder %s46, %s47
    %p59 = scmp.eq.s32.totalorder %s16, 2
    %p60 = por %p58, %p59
    %p62 = scmp.ne.s32.totalorder %s47, %s61
    %p63 = scmp.eq.s32.totalorder %s16, 0
    %p64 = por %p62, %p63
    %s65 = ssub.s32 %s10, %s17
    %p66 = scmp.eq.s32.totalorder %s65, 0
    %s68 = sadd.s32 %s67, 1
    %s69 = scalar_select %p66, %s67, %s68
    %p72 = pneg %p66
    %p73 = scmp.eq.s32.totalorder %s10, 2
    %p74 = por %p72, %p73
    %p75 = scmp.ne.s32.totalorder %s67, %s70
    %p76 = scmp.eq.s32.totalorder %s10, 0
    %p77 = por %p75, %p76
    %p78 = scmp.ne.s32.totalorder %s67, %s70
    %p79 = scmp.eq.s32.totalorder %s15, 2
    %p80 = por %p78, %p79
    %p81 = scmp.ne.s32.totalorder %s70, %s71
    %p82 = scmp.eq.s32.totalorder %s15, 0
    %p83 = por %p81, %p82
    %p84 = scmp.ne.s32.totalorder %s70, %s71
    %p85 = scmp.eq.s32.totalorder %s16, 2
    %p86 = por %p84, %p85
    %p88 = scmp.ne.s32.totalorder %s71, %s87
    %p89 = scmp.eq.s32.totalorder %s16, 0
    %p90 = por %p88, %p89
    %s91 = ssub.s32 %s10, %s17
    %p92 = scmp.eq.s32.totalorder %s91, 0
    %s94 = sadd.s32 %s93, 1
    %s95 = scalar_select %p92, %s93, %s94
    %p98 = pneg %p92
    %p99 = scmp.eq.s32.totalorder %s10, 2
    %p100 = por %p98, %p99
    %p101 = scmp.ne.s32.totalorder %s93, %s96
    %p102 = scmp.eq.s32.totalorder %s10, 0
    %p103 = por %p101, %p102
    %p104 = scmp.ne.s32.totalorder %s93, %s96
    %p105 = scmp.eq.s32.totalorder %s15, 2
    %p106 = por %p104, %p105
    %p107 = scmp.ne.s32.totalorder %s96, %s97
    %p108 = scmp.eq.s32.totalorder %s15, 0
    %p109 = por %p107, %p108
    %p110 = scmp.ne.s32.totalorder %s96, %s97
    %p111 = scmp.eq.s32.totalorder %s16, 2
    %p112 = por %p110, %p111
    %p114 = scmp.ne.s32.totalorder %s97, %s113
    %p115 = scmp.eq.s32.totalorder %s16, 0
    %p116 = por %p114, %p115
    %p117 = scmp.le.s32.totalorder 1, %s10
    %p118 = scmp.lt.s32.totalorder %s10, 4
    %p119 = pnand %p117, %p118
    %p120 = pneg %p119
    // Predicated region
    $region9: #{mink_res_block.4} parent=5 // pred_check
      _
    $region10: #{mink_res_block.4} parent=5 // pred_check_branch
      %122 = sbr.rel (%p119) target = $region12
    $region11: #{mink_res_block.4} parent=5 // pred_region
      %s123 = ssub.s32 %s10, 1
      // Predicated region
      $region13: #{mink_res_block.4} parent=11 // pred_check
        %p124 = pneg %p57
      $region14: #{mink_res_block.4} parent=11 // pred_check_branch
        %126 = sbr.rel (%p124) target = $region16
      $region15: #{mink_res_block.4} parent=11 // pred_region
        _
      $region16: #{mink_res_block.4} parent=11 // pred_fallthru
        _
    $region12: #{mink_res_block.4} parent=5 // pred_fallthru
      _
    %p127 = scmp.lt.s32.totalorder %s10, 3
    // Predicated region
    $region17: #{mink_res_block.4} parent=5 // pred_check
      %p128 = pneg %p127
    $region18: #{mink_res_block.4} parent=5 // pred_check_branch
      %130 = sbr.rel (%p128) target = $region20
    $region19: #{mink_res_block.4} parent=5 // pred_region
      // Predicated region
      $region21: #{mink_res_block.4} parent=19 // pred_check
        %p131 = pneg %p30
      $region22: #{mink_res_block.4} parent=19 // pred_check_branch
        %133 = sbr.rel (%p131) target = $region24
      $region23: #{mink_res_block.4} parent=19 // pred_region
        %s134 = smul.u32 32, %s10
        %p135 = scmp.lt.s32.totalorder %s134, 95
        %s136 = scalar_select %p135, %s134, 95
        %s137 = smul.addr %s136, 7
        %s138 = smul.addr %s137, 4
        %s139 = scalar_lea.vmem %s0, %s138
        %s140 = smul.u32 32, %s10
      $region24: #{mink_res_block.4} parent=19 // pred_fallthru
        _
    $region20: #{mink_res_block.4} parent=5 // pred_fallthru
      _
    %p141 = scmp.le.s32.totalorder 1, %s10
    %p142 = scmp.lt.s32.totalorder %s10, 4
    %p143 = pnand %p141, %p142
    %p144 = pneg %p143
    // Predicated region
    $region25: #{mink_res_block.4} parent=5 // pred_check
      _
    $region26: #{mink_res_block.4} parent=5 // pred_check_branch
      %146 = sbr.rel (%p143) target = $region28
    $region27: #{mink_res_block.4} parent=5 // pred_region
      %s147 = ssub.s32 %s10, 1
      %s148 = smul.u32 32, %s15
      %p149 = scmp.lt.s32.totalorder %s148, 95
      %s150 = scalar_select %p149, %s148, 95
      %s151 = smul.addr %s150, 7
      %s152 = smul.addr %s151, 4
      %s153 = scalar_lea.vmem %s0, %s152
      %p154 = pneg %p36
      %p155 = pneg %p33
      %p156 = pneg %p57
      %p157 = pneg %p54
      %p158 = pneg %p83
      %p159 = pneg %p80
      %s160 = smul.u32 32, %s15
      %p161 = scmp.lt.s32.totalorder %s160, 95
      %s162 = scalar_select %p161, %s160, 95
      %s163 = smul.addr %s162, 4
      %s164 = scalar_lea.vmem %s2, %s163
      %p165 = pneg %p109
      %p166 = pneg %p106
      %p167 = scmp.lt.s32.totalorder %s15, 2
      %s168 = scalar_select %p167, %s15, 2
      %s169 = smul.addr %s168, 8
      %s170 = scalar_lea.vmem %s3, %s169
      %s171 = smul.u32 32, %s15
      %p172 = scmp.lt.s32.totalorder %s171, 95
      %s173 = scalar_select %p172, %s171, 95
      %s174 = smul.addr %s173, 7
      %s175 = smul.addr %s174, 4
      %s176 = scalar_lea.vmem %s0, %s175
      %s177 = smul.u32 32, %s15
      %s178 = smul.u32 32, %s15
      %p179 = scmp.lt.s32.totalorder %s178, 95
      %s180 = scalar_select %p179, %s178, 95
      %s181 = smul.addr %s180, 4
      %s182 = scalar_lea.vmem %s2, %s181
      %s183 = smul.u32 32, %s15
      %p184 = scmp.lt.s32.totalorder %s15, 2
      %s185 = scalar_select %p184, %s15, 2
      %s186 = smul.addr %s185, 8
      %s187 = scalar_lea.vmem %s3, %s186
      %v189 = vld [vmem:[%s176] sm:$0xff]
      %v190 = vld [vmem:[%s176 + $0x8] sm:$0xff]
      %v191 = vld [vmem:[%s176 + $0x10] sm:$0xff]
      %v192 = vld [vmem:[%s176 + $0x18] sm:$0xf]
      %v193 = vld [vmem:[%s176 + $0x1c] sm:$0xff]
      %v194 = vld [vmem:[%s176 + $0x24] sm:$0xff]
      %v195 = vld [vmem:[%s176 + $0x2c] sm:$0xff]
      %v196 = vld [vmem:[%s176 + $0x34] sm:$0xf]
      %v197 = vld [vmem:[%s176 + $0x38] sm:$0xff]
      %v198 = vld [vmem:[%s176 + $0x40] sm:$0xff]
      %v199 = vld [vmem:[%s176 + $0x48] sm:$0xff]
      %v200 = vld [vmem:[%s176 + $0x50] sm:$0xf]
      %v201 = vld [vmem:[%s176 + $0x54] sm:$0xff]
      %v202 = vld [vmem:[%s176 + $0x5c] sm:$0xff]
      %v203 = vld [vmem:[%s176 + $0x64] sm:$0xff]
      %v204 = vld [vmem:[%s176 + $0x6c] sm:$0xf]
      %v205 = vld [vmem:[%s176 + $0x70] sm:$0xff]
      %v206 = vld [vmem:[%s176 + $0x78] sm:$0xff]
      %v207 = vld [vmem:[%s176 + $0x80] sm:$0xff]
      %v208 = vld [vmem:[%s176 + $0x88] sm:$0xf]
      %v209 = vld [vmem:[%s176 + $0x8c] sm:$0xff]
      %v210 = vld [vmem:[%s176 + $0x94] sm:$0xff]
      %v211 = vld [vmem:[%s176 + $0x9c] sm:$0xff]
      %v212 = vld [vmem:[%s176 + $0xa4] sm:$0xf]
      %v213 = vld [vmem:[%s176 + $0xa8] sm:$0xff]
      %v214 = vld [vmem:[%s176 + $0xb0] sm:$0xff]
      %v215 = vld [vmem:[%s176 + $0xb8] sm:$0xff]
      %v216 = vld [vmem:[%s176 + $0xc0] sm:$0xf]
      %v217 = vld [vmem:[%s176 + $0xc4] sm:$0xff]
      %v218 = vld [vmem:[%s176 + $0xcc] sm:$0xff]
      %v219 = vld [vmem:[%s176 + $0xd4] sm:$0xff]
      %v220 = vld [vmem:[%s176 + $0xdc] sm:$0xf]
      %v221 = vld [vmem:[%s176 + $0xe0] sm:$0xff]
      %v222 = vld [vmem:[%s176 + $0xe8] sm:$0xff]
      %v223 = vld [vmem:[%s176 + $0xf0] sm:$0xff]
      %v224 = vld [vmem:[%s176 + $0xf8] sm:$0xf]
      %v225 = vld [vmem:[%s176 + $0xfc] sm:$0xff]
      %v226 = vld [vmem:[%s176 + $0x104] sm:$0xff]
      %v227 = vld [vmem:[%s176 + $0x10c] sm:$0xff]
      %v228 = vld [vmem:[%s176 + $0x114] sm:$0xf]
      %v229 = vld [vmem:[%s176 + $0x118] sm:$0xff]
      %v230 = vld [vmem:[%s176 + $0x120] sm:$0xff]
      %v231 = vld [vmem:[%s176 + $0x128] sm:$0xff]
      %v232 = vld [vmem:[%s176 + $0x130] sm:$0xf]
      %v233 = vld [vmem:[%s176 + $0x134] sm:$0xff]
      %v234 = vld [vmem:[%s176 + $0x13c] sm:$0xff]
      %v235 = vld [vmem:[%s176 + $0x144] sm:$0xff]
      %v236 = vld [vmem:[%s176 + $0x14c] sm:$0xf]
      %v237 = vld [vmem:[%s176 + $0x150] sm:$0xff]
      %v238 = vld [vmem:[%s176 + $0x158] sm:$0xff]
      %v239 = vld [vmem:[%s176 + $0x160] sm:$0xff]
      %v240 = vld [vmem:[%s176 + $0x168] sm:$0xf]
      %v241 = vld [vmem:[%s176 + $0x16c] sm:$0xff]
      %v242 = vld [vmem:[%s176 + $0x174] sm:$0xff]
      %v243 = vld [vmem:[%s176 + $0x17c] sm:$0xff]
      %v244 = vld [vmem:[%s176 + $0x184] sm:$0xf]
      %v245 = vld [vmem:[%s176 + $0x188] sm:$0xff]
      %v246 = vld [vmem:[%s176 + $0x190] sm:$0xff]
      %v247 = vld [vmem:[%s176 + $0x198] sm:$0xff]
      %v248 = vld [vmem:[%s176 + $0x1a0] sm:$0xf]
      %v249 = vld [vmem:[%s176 + $0x1a4] sm:$0xff]
      %v250 = vld [vmem:[%s176 + $0x1ac] sm:$0xff]
      %v251 = vld [vmem:[%s176 + $0x1b4] sm:$0xff]
      %v252 = vld [vmem:[%s176 + $0x1bc] sm:$0xf]
      %v253 = vld [vmem:[%s176 + $0x1c0] sm:$0xff]
      %v254 = vld [vmem:[%s176 + $0x1c8] sm:$0xff]
      %v255 = vld [vmem:[%s176 + $0x1d0] sm:$0xff]
      %v256 = vld [vmem:[%s176 + $0x1d8] sm:$0xf]
      %v257 = vld [vmem:[%s176 + $0x1dc] sm:$0xff]
      %v258 = vld [vmem:[%s176 + $0x1e4] sm:$0xff]
      %v259 = vld [vmem:[%s176 + $0x1ec] sm:$0xff]
      %v260 = vld [vmem:[%s176 + $0x1f4] sm:$0xf]
      %v261 = vld [vmem:[%s176 + $0x1f8] sm:$0xff]
      %v262 = vld [vmem:[%s176 + $0x200] sm:$0xff]
      %v263 = vld [vmem:[%s176 + $0x208] sm:$0xff]
      %v264 = vld [vmem:[%s176 + $0x210] sm:$0xf]
      %v265 = vld [vmem:[%s176 + $0x214] sm:$0xff]
      %v266 = vld [vmem:[%s176 + $0x21c] sm:$0xff]
      %v267 = vld [vmem:[%s176 + $0x224] sm:$0xff]
      %v268 = vld [vmem:[%s176 + $0x22c] sm:$0xf]
      %v269 = vld [vmem:[%s176 + $0x230] sm:$0xff]
      %v270 = vld [vmem:[%s176 + $0x238] sm:$0xff]
      %v271 = vld [vmem:[%s176 + $0x240] sm:$0xff]
      %v272 = vld [vmem:[%s176 + $0x248] sm:$0xf]
      %v273 = vld [vmem:[%s176 + $0x24c] sm:$0xff]
      %v274 = vld [vmem:[%s176 + $0x254] sm:$0xff]
      %v275 = vld [vmem:[%s176 + $0x25c] sm:$0xff]
      %v276 = vld [vmem:[%s176 + $0x264] sm:$0xf]
      %v277 = vld [vmem:[%s176 + $0x268] sm:$0xff]
      %v278 = vld [vmem:[%s176 + $0x270] sm:$0xff]
      %v279 = vld [vmem:[%s176 + $0x278] sm:$0xff]
      %v280 = vld [vmem:[%s176 + $0x280] sm:$0xf]
      %v281 = vld [vmem:[%s176 + $0x284] sm:$0xff]
      %v282 = vld [vmem:[%s176 + $0x28c] sm:$0xff]
      %v283 = vld [vmem:[%s176 + $0x294] sm:$0xff]
      %v284 = vld [vmem:[%s176 + $0x29c] sm:$0xf]
      %v285 = vld [vmem:[%s176 + $0x2a0] sm:$0xff]
      %v286 = vld [vmem:[%s176 + $0x2a8] sm:$0xff]
      %v287 = vld [vmem:[%s176 + $0x2b0] sm:$0xff]
      %v288 = vld [vmem:[%s176 + $0x2b8] sm:$0xf]
      %v289 = vld [vmem:[%s176 + $0x2bc] sm:$0xff]
      %v290 = vld [vmem:[%s176 + $0x2c4] sm:$0xff]
      %v291 = vld [vmem:[%s176 + $0x2cc] sm:$0xff]
      %v292 = vld [vmem:[%s176 + $0x2d4] sm:$0xf]
      %v293 = vld [vmem:[%s176 + $0x2d8] sm:$0xff]
      %v294 = vld [vmem:[%s176 + $0x2e0] sm:$0xff]
      %v295 = vld [vmem:[%s176 + $0x2e8] sm:$0xff]
      %v296 = vld [vmem:[%s176 + $0x2f0] sm:$0xf]
      %v297 = vld [vmem:[%s176 + $0x2f4] sm:$0xff]
      %v298 = vld [vmem:[%s176 + $0x2fc] sm:$0xff]
      %v299 = vld [vmem:[%s176 + $0x304] sm:$0xff]
      %v300 = vld [vmem:[%s176 + $0x30c] sm:$0xf]
      %v301 = vld [vmem:[%s176 + $0x310] sm:$0xff]
      %v302 = vld [vmem:[%s176 + $0x318] sm:$0xff]
      %v303 = vld [vmem:[%s176 + $0x320] sm:$0xff]
      %v304 = vld [vmem:[%s176 + $0x328] sm:$0xf]
      %v305 = vld [vmem:[%s176 + $0x32c] sm:$0xff]
      %v306 = vld [vmem:[%s176 + $0x334] sm:$0xff]
      %v307 = vld [vmem:[%s176 + $0x33c] sm:$0xff]
      %v308 = vld [vmem:[%s176 + $0x344] sm:$0xf]
      %v309 = vld [vmem:[%s176 + $0x348] sm:$0xff]
      %v310 = vld [vmem:[%s176 + $0x350] sm:$0xff]
      %v311 = vld [vmem:[%s176 + $0x358] sm:$0xff]
      %v312 = vld [vmem:[%s176 + $0x360] sm:$0xf]
      %v313 = vld [vmem:[%s176 + $0x364] sm:$0xff]
      %v314 = vld [vmem:[%s176 + $0x36c] sm:$0xff]
      %v315 = vld [vmem:[%s176 + $0x374] sm:$0xff]
      %v316 = vld [vmem:[%s176 + $0x37c] sm:$0xf]
      %v317 = vld [vmem:[%s1] sm:$0xf]
      %v318 = vld [vmem:[%s1 + $0x4] sm:$0xf]
      %v319 = vld [vmem:[%s1 + $0x8] sm:$0xf]
      %v320 = vld [vmem:[%s1 + $0xc] sm:$0xf]
      %v321 = vld [vmem:[%s1 + $0x10] sm:$0xf]
      %v322 = vld [vmem:[%s1 + $0x14] sm:$0xf]
      %v323 = vld [vmem:[%s1 + $0x18] sm:$0xf]
      %v324 = vld [vmem:[%s1 + $0x1c] sm:$0xf]
      %v325 = vld [vmem:[%s1 + $0x20] sm:$0xf]
      %v326 = vld [vmem:[%s1 + $0x24] sm:$0xf]
      %v327 = vld [vmem:[%s1 + $0x28] sm:$0xf]
      %v328 = vld [vmem:[%s1 + $0x2c] sm:$0xf]
      %v329 = vld [vmem:[%s1 + $0x30] sm:$0xf]
      %v330 = vld [vmem:[%s1 + $0x34] sm:$0xf]
      %v331 = vld [vmem:[%s1 + $0x38] sm:$0xf]
      %v332 = vld [vmem:[%s1 + $0x3c] sm:$0xf]
      %v333 = vld [vmem:[%s1 + $0x40] sm:$0xf]
      %v334 = vld [vmem:[%s1 + $0x44] sm:$0xf]
      %v335 = vld [vmem:[%s1 + $0x48] sm:$0xf]
      %v336 = vld [vmem:[%s1 + $0x4c] sm:$0xf]
      %v337 = vld [vmem:[%s1 + $0x50] sm:$0xf]
      %v338 = vld [vmem:[%s1 + $0x54] sm:$0xf]
      %v339 = vld [vmem:[%s1 + $0x58] sm:$0xf]
      %v340 = vld [vmem:[%s1 + $0x5c] sm:$0xf]
      %v341 = vld [vmem:[%s1 + $0x60] sm:$0xf]
      %v342 = vld [vmem:[%s1 + $0x64] sm:$0xf]
      %v343 = vld [vmem:[%s1 + $0x68] sm:$0xf]
      %v344 = vld [vmem:[%s1 + $0x6c] sm:$0xf]
      %v345 = vld [vmem:[%s1 + $0x70] sm:$0xf]
      %v346 = vld [vmem:[%s1 + $0x74] sm:$0xf]
      %v347 = vld [vmem:[%s1 + $0x78] sm:$0xf]
      %v348 = vld [vmem:[%s1 + $0x7c] sm:$0xf]
      %v349 = vld [vmem:[%s1 + $0x80] sm:$0xf]
      %v350 = vld [vmem:[%s1 + $0x84] sm:$0xf]
      %v351 = vld [vmem:[%s1 + $0x88] sm:$0xf]
      %v352 = vld [vmem:[%s1 + $0x8c] sm:$0xf]
      %v353 = vld [vmem:[%s1 + $0x90] sm:$0xf]
      %v354 = vld [vmem:[%s1 + $0x94] sm:$0xf]
      %v355 = vld [vmem:[%s1 + $0x98] sm:$0xf]
      %v356 = vld [vmem:[%s1 + $0x9c] sm:$0xf]
      %v357 = vld [vmem:[%s1 + $0xa0] sm:$0xf]
      %v358 = vld [vmem:[%s1 + $0xa4] sm:$0xf]
      %v359 = vld [vmem:[%s1 + $0xa8] sm:$0xf]
      %v360 = vld [vmem:[%s1 + $0xac] sm:$0xf]
      %v361 = vld [vmem:[%s1 + $0xb0] sm:$0xf]
      %v362 = vld [vmem:[%s1 + $0xb4] sm:$0xf]
      %v363 = vld [vmem:[%s1 + $0xb8] sm:$0xf]
      %v364 = vld [vmem:[%s1 + $0xbc] sm:$0xf]
      %v365 = vld [vmem:[%s1 + $0xc0] sm:$0xf]
      %v366 = vld [vmem:[%s1 + $0xc4] sm:$0xf]
      %v367 = vld [vmem:[%s1 + $0xc8] sm:$0xf]
      %v368 = vld [vmem:[%s1 + $0xcc] sm:$0xf]
      %v369 = vld [vmem:[%s1 + $0xd0] sm:$0xf]
      %v370 = vld [vmem:[%s1 + $0xd4] sm:$0xf]
      %v371 = vld [vmem:[%s1 + $0xd8] sm:$0xf]
      %v372 = vld [vmem:[%s1 + $0xdc] sm:$0xf]
      %v373 = vld [vmem:[%s1 + $0xe0] sm:$0xf]
      %v374 = vld [vmem:[%s1 + $0xe4] sm:$0xf]
      %v375 = vld [vmem:[%s1 + $0xe8] sm:$0xf]
      %v376 = vld [vmem:[%s1 + $0xec] sm:$0xf]
      %v377 = vld [vmem:[%s1 + $0xf0] sm:$0xf]
      %v378 = vld [vmem:[%s1 + $0xf4] sm:$0xf]
      %v379 = vld [vmem:[%s1 + $0xf8] sm:$0xf]
      %v380 = vld [vmem:[%s1 + $0xfc] sm:$0xf]
      %v381 = vld [vmem:[%s1 + $0x100] sm:$0xf]
      %v382 = vld [vmem:[%s1 + $0x104] sm:$0xf]
      %v383 = vld [vmem:[%s1 + $0x108] sm:$0xf]
      %v384 = vld [vmem:[%s1 + $0x10c] sm:$0xf]
      %v385 = vld [vmem:[%s1 + $0x110] sm:$0xf]
      %v386 = vld [vmem:[%s1 + $0x114] sm:$0xf]
      %v387 = vld [vmem:[%s1 + $0x118] sm:$0xf]
      %v388 = vld [vmem:[%s1 + $0x11c] sm:$0xf]
      %v389 = vld [vmem:[%s1 + $0x120] sm:$0xf]
      %v390 = vld [vmem:[%s1 + $0x124] sm:$0xf]
      %v391 = vld [vmem:[%s1 + $0x128] sm:$0xf]
      %v392 = vld [vmem:[%s1 + $0x12c] sm:$0xf]
      %v393 = vld [vmem:[%s1 + $0x130] sm:$0xf]
      %v394 = vld [vmem:[%s1 + $0x134] sm:$0xf]
      %v395 = vld [vmem:[%s1 + $0x138] sm:$0xf]
      %v396 = vld [vmem:[%s1 + $0x13c] sm:$0xf]
      %v397 = vld [vmem:[%s1 + $0x140] sm:$0xf]
      %v398 = vld [vmem:[%s1 + $0x144] sm:$0xf]
      %v399 = vld [vmem:[%s1 + $0x148] sm:$0xf]
      %v400 = vld [vmem:[%s1 + $0x14c] sm:$0xf]
      %v401 = vld [vmem:[%s1 + $0x150] sm:$0xf]
      %v402 = vld [vmem:[%s1 + $0x154] sm:$0xf]
      %v403 = vld [vmem:[%s1 + $0x158] sm:$0xf]
      %v404 = vld [vmem:[%s1 + $0x15c] sm:$0xf]
      %v405 = vld [vmem:[%s1 + $0x160] sm:$0xf]
      %v406 = vld [vmem:[%s1 + $0x164] sm:$0xf]
      %v407 = vld [vmem:[%s1 + $0x168] sm:$0xf]
      %v408 = vld [vmem:[%s1 + $0x16c] sm:$0xf]
      %v409 = vld [vmem:[%s1 + $0x170] sm:$0xf]
      %v410 = vld [vmem:[%s1 + $0x174] sm:$0xf]
      %v411 = vld [vmem:[%s1 + $0x178] sm:$0xf]
      %v412 = vld [vmem:[%s1 + $0x17c] sm:$0xf]
      %v413 = vld [vmem:[%s1 + $0x180] sm:$0xf]
      %v414 = vld [vmem:[%s1 + $0x184] sm:$0xf]
      %v415 = vld [vmem:[%s1 + $0x188] sm:$0xf]
      %v416 = vld [vmem:[%s1 + $0x18c] sm:$0xf]
      %v417 = vld [vmem:[%s1 + $0x190] sm:$0xf]
      %v418 = vld [vmem:[%s1 + $0x194] sm:$0xf]
      %v419 = vld [vmem:[%s1 + $0x198] sm:$0xf]
      %v420 = vld [vmem:[%s1 + $0x19c] sm:$0xf]
      %v421 = vld [vmem:[%s1 + $0x1a0] sm:$0xf]
      %v422 = vld [vmem:[%s1 + $0x1a4] sm:$0xf]
      %v423 = vld [vmem:[%s1 + $0x1a8] sm:$0xf]
      %v424 = vld [vmem:[%s1 + $0x1ac] sm:$0xf]
      %v553 = vunpack.c.l.b16 %v189
      %v554 = vunpack.c.h.b16 %v189
      %v555 = vunpack.c.l.b16 %v190
      %v556 = vunpack.c.h.b16 %v190
      %v557 = vunpack.c.l.b16 %v191
      %v558 = vunpack.c.h.b16 %v191
      %v559 = vunpack.c.l.b16 %v192
      %v560 = vunpack.c.l.b16 %v193
      %v561 = vunpack.c.h.b16 %v193
      %v562 = vunpack.c.l.b16 %v194
      %v563 = vunpack.c.h.b16 %v194
      %v564 = vunpack.c.l.b16 %v195
      %v565 = vunpack.c.h.b16 %v195
      %v566 = vunpack.c.l.b16 %v196
      %v567 = vunpack.c.l.b16 %v197
      %v568 = vunpack.c.h.b16 %v197
      %v569 = vunpack.c.l.b16 %v198
      %v570 = vunpack.c.h.b16 %v198
      %v571 = vunpack.c.l.b16 %v199
      %v572 = vunpack.c.h.b16 %v199
      %v573 = vunpack.c.l.b16 %v200
      %v574 = vunpack.c.l.b16 %v201
      %v575 = vunpack.c.h.b16 %v201
      %v576 = vunpack.c.l.b16 %v202
      %v577 = vunpack.c.h.b16 %v202
      %v578 = vunpack.c.l.b16 %v203
      %v579 = vunpack.c.h.b16 %v203
      %v580 = vunpack.c.l.b16 %v204
      %v581 = vunpack.c.l.b16 %v205
      %v582 = vunpack.c.h.b16 %v205
      %v583 = vunpack.c.l.b16 %v206
      %v584 = vunpack.c.h.b16 %v206
      %v585 = vunpack.c.l.b16 %v207
      %v586 = vunpack.c.h.b16 %v207
      %v587 = vunpack.c.l.b16 %v208
      %v588 = vunpack.c.l.b16 %v209
      %v589 = vunpack.c.h.b16 %v209
      %v590 = vunpack.c.l.b16 %v210
      %v591 = vunpack.c.h.b16 %v210
      %v592 = vunpack.c.l.b16 %v211
      %v593 = vunpack.c.h.b16 %v211
      %v594 = vunpack.c.l.b16 %v212
      %v595 = vunpack.c.l.b16 %v213
      %v596 = vunpack.c.h.b16 %v213
      %v597 = vunpack.c.l.b16 %v214
      %v598 = vunpack.c.h.b16 %v214
      %v599 = vunpack.c.l.b16 %v215
      %v600 = vunpack.c.h.b16 %v215
      %v601 = vunpack.c.l.b16 %v216
      %v602 = vunpack.c.l.b16 %v217
      %v603 = vunpack.c.h.b16 %v217
      %v604 = vunpack.c.l.b16 %v218
      %v605 = vunpack.c.h.b16 %v218
      %v606 = vunpack.c.l.b16 %v219
      %v607 = vunpack.c.h.b16 %v219
      %v608 = vunpack.c.l.b16 %v220
      %v609 = vunpack.c.l.b16 %v221
      %v610 = vunpack.c.h.b16 %v221
      %v611 = vunpack.c.l.b16 %v222
      %v612 = vunpack.c.h.b16 %v222
      %v613 = vunpack.c.l.b16 %v223
      %v614 = vunpack.c.h.b16 %v223
      %v615 = vunpack.c.l.b16 %v224
      %v616 = vunpack.c.l.b16 %v225
      %v617 = vunpack.c.h.b16 %v225
      %v618 = vunpack.c.l.b16 %v226
      %v619 = vunpack.c.h.b16 %v226
      %v620 = vunpack.c.l.b16 %v227
      %v621 = vunpack.c.h.b16 %v227
      %v622 = vunpack.c.l.b16 %v228
      %v623 = vunpack.c.l.b16 %v229
      %v624 = vunpack.c.h.b16 %v229
      %v625 = vunpack.c.l.b16 %v230
      %v626 = vunpack.c.h.b16 %v230
      %v627 = vunpack.c.l.b16 %v231
      %v628 = vunpack.c.h.b16 %v231
      %v629 = vunpack.c.l.b16 %v232
      %v630 = vunpack.c.l.b16 %v233
      %v631 = vunpack.c.h.b16 %v233
      %v632 = vunpack.c.l.b16 %v234
      %v633 = vunpack.c.h.b16 %v234
      %v634 = vunpack.c.l.b16 %v235
      %v635 = vunpack.c.h.b16 %v235
      %v636 = vunpack.c.l.b16 %v236
      %v637 = vunpack.c.l.b16 %v237
      %v638 = vunpack.c.h.b16 %v237
      %v639 = vunpack.c.l.b16 %v238
      %v640 = vunpack.c.h.b16 %v238
      %v641 = vunpack.c.l.b16 %v239
      %v642 = vunpack.c.h.b16 %v239
      %v643 = vunpack.c.l.b16 %v240
      %v644 = vunpack.c.l.b16 %v241
      %v645 = vunpack.c.h.b16 %v241
      %v646 = vunpack.c.l.b16 %v242
      %v647 = vunpack.c.h.b16 %v242
      %v648 = vunpack.c.l.b16 %v243
      %v649 = vunpack.c.h.b16 %v243
      %v650 = vunpack.c.l.b16 %v244
      %v651 = vunpack.c.l.b16 %v245
      %v652 = vunpack.c.h.b16 %v245
      %v653 = vunpack.c.l.b16 %v246
      %v654 = vunpack.c.h.b16 %v246
      %v655 = vunpack.c.l.b16 %v247
      %v656 = vunpack.c.h.b16 %v247
      %v657 = vunpack.c.l.b16 %v248
      %v658 = vunpack.c.l.b16 %v249
      %v659 = vunpack.c.h.b16 %v249
      %v660 = vunpack.c.l.b16 %v250
      %v661 = vunpack.c.h.b16 %v250
      %v662 = vunpack.c.l.b16 %v251
      %v663 = vunpack.c.h.b16 %v251
      %v664 = vunpack.c.l.b16 %v252
      %v665 = vunpack.c.l.b16 %v253
      %v666 = vunpack.c.h.b16 %v253
      %v667 = vunpack.c.l.b16 %v254
      %v668 = vunpack.c.h.b16 %v254
      %v669 = vunpack.c.l.b16 %v255
      %v670 = vunpack.c.h.b16 %v255
      %v671 = vunpack.c.l.b16 %v256
      %v672 = vunpack.c.l.b16 %v257
      %v673 = vunpack.c.h.b16 %v257
      %v674 = vunpack.c.l.b16 %v258
      %v675 = vunpack.c.h.b16 %v258
      %v676 = vunpack.c.l.b16 %v259
      %v677 = vunpack.c.h.b16 %v259
      %v678 = vunpack.c.l.b16 %v260
      %v679 = vunpack.c.l.b16 %v261
      %v680 = vunpack.c.h.b16 %v261
      %v681 = vunpack.c.l.b16 %v262
      %v682 = vunpack.c.h.b16 %v262
      %v683 = vunpack.c.l.b16 %v263
      %v684 = vunpack.c.h.b16 %v263
      %v685 = vunpack.c.l.b16 %v264
      %v686 = vunpack.c.l.b16 %v265
      %v687 = vunpack.c.h.b16 %v265
      %v688 = vunpack.c.l.b16 %v266
      %v689 = vunpack.c.h.b16 %v266
      %v690 = vunpack.c.l.b16 %v267
      %v691 = vunpack.c.h.b16 %v267
      %v692 = vunpack.c.l.b16 %v268
      %v693 = vunpack.c.l.b16 %v269
      %v694 = vunpack.c.h.b16 %v269
      %v695 = vunpack.c.l.b16 %v270
      %v696 = vunpack.c.h.b16 %v270
      %v697 = vunpack.c.l.b16 %v271
      %v698 = vunpack.c.h.b16 %v271
      %v699 = vunpack.c.l.b16 %v272
      %v700 = vunpack.c.l.b16 %v273
      %v701 = vunpack.c.h.b16 %v273
      %v702 = vunpack.c.l.b16 %v274
      %v703 = vunpack.c.h.b16 %v274
      %v704 = vunpack.c.l.b16 %v275
      %v705 = vunpack.c.h.b16 %v275
      %v706 = vunpack.c.l.b16 %v276
      %v707 = vunpack.c.l.b16 %v277
      %v708 = vunpack.c.h.b16 %v277
      %v709 = vunpack.c.l.b16 %v278
      %v710 = vunpack.c.h.b16 %v278
      %v711 = vunpack.c.l.b16 %v279
      %v712 = vunpack.c.h.b16 %v279
      %v713 = vunpack.c.l.b16 %v280
      %v714 = vunpack.c.l.b16 %v281
      %v715 = vunpack.c.h.b16 %v281
      %v716 = vunpack.c.l.b16 %v282
      %v717 = vunpack.c.h.b16 %v282
      %v718 = vunpack.c.l.b16 %v283
      %v719 = vunpack.c.h.b16 %v283
      %v720 = vunpack.c.l.b16 %v284
      %v721 = vunpack.c.l.b16 %v285
      %v722 = vunpack.c.h.b16 %v285
      %v723 = vunpack.c.l.b16 %v286
      %v724 = vunpack.c.h.b16 %v286
      %v725 = vunpack.c.l.b16 %v287
      %v726 = vunpack.c.h.b16 %v287
      %v727 = vunpack.c.l.b16 %v288
      %v728 = vunpack.c.l.b16 %v289
      %v729 = vunpack.c.h.b16 %v289
      %v730 = vunpack.c.l.b16 %v290
      %v731 = vunpack.c.h.b16 %v290
      %v732 = vunpack.c.l.b16 %v291
      %v733 = vunpack.c.h.b16 %v291
      %v734 = vunpack.c.l.b16 %v292
      %v735 = vunpack.c.l.b16 %v293
      %v736 = vunpack.c.h.b16 %v293
      %v737 = vunpack.c.l.b16 %v294
      %v738 = vunpack.c.h.b16 %v294
      %v739 = vunpack.c.l.b16 %v295
      %v740 = vunpack.c.h.b16 %v295
      %v741 = vunpack.c.l.b16 %v296
      %v742 = vunpack.c.l.b16 %v297
      %v743 = vunpack.c.h.b16 %v297
      %v744 = vunpack.c.l.b16 %v298
      %v745 = vunpack.c.h.b16 %v298
      %v746 = vunpack.c.l.b16 %v299
      %v747 = vunpack.c.h.b16 %v299
      %v748 = vunpack.c.l.b16 %v300
      %v749 = vunpack.c.l.b16 %v301
      %v750 = vunpack.c.h.b16 %v301
      %v751 = vunpack.c.l.b16 %v302
      %v752 = vunpack.c.h.b16 %v302
      %v753 = vunpack.c.l.b16 %v303
      %v754 = vunpack.c.h.b16 %v303
      %v755 = vunpack.c.l.b16 %v304
      %v756 = vunpack.c.l.b16 %v305
      %v757 = vunpack.c.h.b16 %v305
      %v758 = vunpack.c.l.b16 %v306
      %v759 = vunpack.c.h.b16 %v306
      %v760 = vunpack.c.l.b16 %v307
      %v761 = vunpack.c.h.b16 %v307
      %v762 = vunpack.c.l.b16 %v308
      %v763 = vunpack.c.l.b16 %v309
      %v764 = vunpack.c.h.b16 %v309
      %v765 = vunpack.c.l.b16 %v310
      %v766 = vunpack.c.h.b16 %v310
      %v767 = vunpack.c.l.b16 %v311
      %v768 = vunpack.c.h.b16 %v311
      %v769 = vunpack.c.l.b16 %v312
      %v770 = vunpack.c.l.b16 %v313
      %v771 = vunpack.c.h.b16 %v313
      %v772 = vunpack.c.l.b16 %v314
      %v773 = vunpack.c.h.b16 %v314
      %v774 = vunpack.c.l.b16 %v315
      %v775 = vunpack.c.h.b16 %v315
      %v776 = vunpack.c.l.b16 %v316
      %v777 = vpack.c.b16 %v560, %v553
      %v778 = vpack.c.b16 %v561, %v554
      %v779 = vpack.c.b16 %v562, %v555
      %v780 = vpack.c.b16 %v563, %v556
      %v781 = vpack.c.b16 %v564, %v557
      %v782 = vpack.c.b16 %v565, %v558
      %v783 = vpack.c.b16 %v566, %v559
      %v784 = vpack.c.b16 %v574, %v567
      %v785 = vpack.c.b16 %v575, %v568
      %v786 = vpack.c.b16 %v576, %v569
      %v787 = vpack.c.b16 %v577, %v570
      %v788 = vpack.c.b16 %v578, %v571
      %v789 = vpack.c.b16 %v579, %v572
      %v790 = vpack.c.b16 %v580, %v573
      %v791 = vpack.c.b16 %v588, %v581
      %v792 = vpack.c.b16 %v589, %v582
      %v793 = vpack.c.b16 %v590, %v583
      %v794 = vpack.c.b16 %v591, %v584
      %v795 = vpack.c.b16 %v592, %v585
      %v796 = vpack.c.b16 %v593, %v586
      %v797 = vpack.c.b16 %v594, %v587
      %v798 = vpack.c.b16 %v602, %v595
      %v799 = vpack.c.b16 %v603, %v596
      %v800 = vpack.c.b16 %v604, %v597
      %v801 = vpack.c.b16 %v605, %v598
      %v802 = vpack.c.b16 %v606, %v599
      %v803 = vpack.c.b16 %v607, %v600
      %v804 = vpack.c.b16 %v608, %v601
      %v805 = vpack.c.b16 %v616, %v609
      %v806 = vpack.c.b16 %v617, %v610
      %v807 = vpack.c.b16 %v618, %v611
      %v808 = vpack.c.b16 %v619, %v612
      %v809 = vpack.c.b16 %v620, %v613
      %v810 = vpack.c.b16 %v621, %v614
      %v811 = vpack.c.b16 %v622, %v615
      %v812 = vpack.c.b16 %v630, %v623
      %v813 = vpack.c.b16 %v631, %v624
      %v814 = vpack.c.b16 %v632, %v625
      %v815 = vpack.c.b16 %v633, %v626
      %v816 = vpack.c.b16 %v634, %v627
      %v817 = vpack.c.b16 %v635, %v628
      %v818 = vpack.c.b16 %v636, %v629
      %v819 = vpack.c.b16 %v644, %v637
      %v820 = vpack.c.b16 %v645, %v638
      %v821 = vpack.c.b16 %v646, %v639
      %v822 = vpack.c.b16 %v647, %v640
      %v823 = vpack.c.b16 %v648, %v641
      %v824 = vpack.c.b16 %v649, %v642
      %v825 = vpack.c.b16 %v650, %v643
      %v826 = vpack.c.b16 %v658, %v651
      %v827 = vpack.c.b16 %v659, %v652
      %v828 = vpack.c.b16 %v660, %v653
      %v829 = vpack.c.b16 %v661, %v654
      %v830 = vpack.c.b16 %v662, %v655
      %v831 = vpack.c.b16 %v663, %v656
      %v832 = vpack.c.b16 %v664, %v657
      %v833 = vpack.c.b16 %v672, %v665
      %v834 = vpack.c.b16 %v673, %v666
      %v835 = vpack.c.b16 %v674, %v667
      %v836 = vpack.c.b16 %v675, %v668
      %v837 = vpack.c.b16 %v676, %v669
      %v838 = vpack.c.b16 %v677, %v670
      %v839 = vpack.c.b16 %v678, %v671
      %v840 = vpack.c.b16 %v686, %v679
      %v841 = vpack.c.b16 %v687, %v680
      %v842 = vpack.c.b16 %v688, %v681
      %v843 = vpack.c.b16 %v689, %v682
      %v844 = vpack.c.b16 %v690, %v683
      %v845 = vpack.c.b16 %v691, %v684
      %v846 = vpack.c.b16 %v692, %v685
      %v847 = vpack.c.b16 %v700, %v693
      %v848 = vpack.c.b16 %v701, %v694
      %v849 = vpack.c.b16 %v702, %v695
      %v850 = vpack.c.b16 %v703, %v696
      %v851 = vpack.c.b16 %v704, %v697
      %v852 = vpack.c.b16 %v705, %v698
      %v853 = vpack.c.b16 %v706, %v699
      %v854 = vpack.c.b16 %v714, %v707
      %v855 = vpack.c.b16 %v715, %v708
      %v856 = vpack.c.b16 %v716, %v709
      %v857 = vpack.c.b16 %v717, %v710
      %v858 = vpack.c.b16 %v718, %v711
      %v859 = vpack.c.b16 %v719, %v712
      %v860 = vpack.c.b16 %v720, %v713
      %v861 = vpack.c.b16 %v728, %v721
      %v862 = vpack.c.b16 %v729, %v722
      %v863 = vpack.c.b16 %v730, %v723
      %v864 = vpack.c.b16 %v731, %v724
      %v865 = vpack.c.b16 %v732, %v725
      %v866 = vpack.c.b16 %v733, %v726
      %v867 = vpack.c.b16 %v734, %v727
      %v868 = vpack.c.b16 %v742, %v735
      %v869 = vpack.c.b16 %v743, %v736
      %v870 = vpack.c.b16 %v744, %v737
      %v871 = vpack.c.b16 %v745, %v738
      %v872 = vpack.c.b16 %v746, %v739
      %v873 = vpack.c.b16 %v747, %v740
      %v874 = vpack.c.b16 %v748, %v741
      %v875 = vpack.c.b16 %v756, %v749
      %v876 = vpack.c.b16 %v757, %v750
      %v877 = vpack.c.b16 %v758, %v751
      %v878 = vpack.c.b16 %v759, %v752
      %v879 = vpack.c.b16 %v760, %v753
      %v880 = vpack.c.b16 %v761, %v754
      %v881 = vpack.c.b16 %v762, %v755
      %v882 = vpack.c.b16 %v770, %v763
      %v883 = vpack.c.b16 %v771, %v764
      %v884 = vpack.c.b16 %v772, %v765
      %v885 = vpack.c.b16 %v773, %v766
      %v886 = vpack.c.b16 %v774, %v767
      %v887 = vpack.c.b16 %v775, %v768
      %v888 = vpack.c.b16 %v776, %v769
      %v1093 = vunpack.c.l.b16 %v317
      %v1094 = vunpack.c.l.b16 %v318
      %v1095 = vunpack.c.l.b16 %v319
      %v1096 = vunpack.c.l.b16 %v320
      %v1097 = vunpack.c.l.b16 %v321
      %v1098 = vunpack.c.l.b16 %v322
      %v1099 = vunpack.c.l.b16 %v323
      %v1100 = vunpack.c.l.b16 %v324
      %v1101 = vunpack.c.l.b16 %v325
      %v1102 = vunpack.c.l.b16 %v326
      %v1103 = vunpack.c.l.b16 %v327
      %v1104 = vunpack.c.l.b16 %v328
      %v1105 = vunpack.c.l.b16 %v329
      %v1106 = vunpack.c.l.b16 %v330
      %v1107 = vunpack.c.l.b16 %v331
      %v1108 = vunpack.c.l.b16 %v332
      %v1109 = vunpack.c.l.b16 %v333
      %v1110 = vunpack.c.l.b16 %v334
      %v1111 = vunpack.c.l.b16 %v335
      %v1112 = vunpack.c.l.b16 %v336
      %v1113 = vunpack.c.l.b16 %v337
      %v1114 = vunpack.c.l.b16 %v338
      %v1115 = vunpack.c.l.b16 %v339
      %v1116 = vunpack.c.l.b16 %v340
      %v1117 = vunpack.c.l.b16 %v341
      %v1118 = vunpack.c.l.b16 %v342
      %v1119 = vunpack.c.l.b16 %v343
      %v1120 = vunpack.c.l.b16 %v344
      %v1121 = vunpack.c.l.b16 %v345
      %v1122 = vunpack.c.l.b16 %v346
      %v1123 = vunpack.c.l.b16 %v347
      %v1124 = vunpack.c.l.b16 %v348
      %v1125 = vunpack.c.l.b16 %v349
      %v1126 = vunpack.c.l.b16 %v350
      %v1127 = vunpack.c.l.b16 %v351
      %v1128 = vunpack.c.l.b16 %v352
      %v1129 = vunpack.c.l.b16 %v353
      %v1130 = vunpack.c.l.b16 %v354
      %v1131 = vunpack.c.l.b16 %v355
      %v1132 = vunpack.c.l.b16 %v356
      %v1133 = vunpack.c.l.b16 %v357
      %v1134 = vunpack.c.l.b16 %v358
      %v1135 = vunpack.c.l.b16 %v359
      %v1136 = vunpack.c.l.b16 %v360
      %v1137 = vunpack.c.l.b16 %v361
      %v1138 = vunpack.c.l.b16 %v362
      %v1139 = vunpack.c.l.b16 %v363
      %v1140 = vunpack.c.l.b16 %v364
      %v1141 = vunpack.c.l.b16 %v365
      %v1142 = vunpack.c.l.b16 %v366
      %v1143 = vunpack.c.l.b16 %v367
      %v1144 = vunpack.c.l.b16 %v368
      %v1145 = vunpack.c.l.b16 %v369
      %v1146 = vunpack.c.l.b16 %v370
      %v1147 = vunpack.c.l.b16 %v371
      %v1148 = vunpack.c.l.b16 %v372
      %v1149 = vunpack.c.l.b16 %v373
      %v1150 = vunpack.c.l.b16 %v374
      %v1151 = vunpack.c.l.b16 %v375
      %v1152 = vunpack.c.l.b16 %v376
      %v1153 = vunpack.c.l.b16 %v377
      %v1154 = vunpack.c.l.b16 %v378
      %v1155 = vunpack.c.l.b16 %v379
      %v1156 = vunpack.c.l.b16 %v380
      %v1157 = vunpack.c.l.b16 %v381
      %v1158 = vunpack.c.l.b16 %v382
      %v1159 = vunpack.c.l.b16 %v383
      %v1160 = vunpack.c.l.b16 %v384
      %v1161 = vunpack.c.l.b16 %v385
      %v1162 = vunpack.c.l.b16 %v386
      %v1163 = vunpack.c.l.b16 %v387
      %v1164 = vunpack.c.l.b16 %v388
      %v1165 = vunpack.c.l.b16 %v389
      %v1166 = vunpack.c.l.b16 %v390
      %v1167 = vunpack.c.l.b16 %v391
      %v1168 = vunpack.c.l.b16 %v392
      %v1169 = vunpack.c.l.b16 %v393
      %v1170 = vunpack.c.l.b16 %v394
      %v1171 = vunpack.c.l.b16 %v395
      %v1172 = vunpack.c.l.b16 %v396
      %v1173 = vunpack.c.l.b16 %v397
      %v1174 = vunpack.c.l.b16 %v398
      %v1175 = vunpack.c.l.b16 %v399
      %v1176 = vunpack.c.l.b16 %v400
      %v1177 = vunpack.c.l.b16 %v401
      %v1178 = vunpack.c.l.b16 %v402
      %v1179 = vunpack.c.l.b16 %v403
      %v1180 = vunpack.c.l.b16 %v404
      %v1181 = vunpack.c.l.b16 %v405
      %v1182 = vunpack.c.l.b16 %v406
      %v1183 = vunpack.c.l.b16 %v407
      %v1184 = vunpack.c.l.b16 %v408
      %v1185 = vunpack.c.l.b16 %v409
      %v1186 = vunpack.c.l.b16 %v410
      %v1187 = vunpack.c.l.b16 %v411
      %v1188 = vunpack.c.l.b16 %v412
      %v1189 = vunpack.c.l.b16 %v413
      %v1190 = vunpack.c.l.b16 %v414
      %v1191 = vunpack.c.l.b16 %v415
      %v1192 = vunpack.c.l.b16 %v416
      %v1193 = vunpack.c.l.b16 %v417
      %v1194 = vunpack.c.l.b16 %v418
      %v1195 = vunpack.c.l.b16 %v419
      %v1196 = vunpack.c.l.b16 %v420
      %v1197 = vunpack.c.l.b16 %v421
      %v1198 = vunpack.c.l.b16 %v422
      %v1199 = vunpack.c.l.b16 %v423
      %v1200 = vunpack.c.l.b16 %v424
      %v1201 = vpack.c.b16 %v1094, %v1093
      %v1202 = vpack.c.b16 %v1096, %v1095
      %v1203 = vpack.c.b16 %v1098, %v1097
      %v1204 = vpack.c.b16 %v1100, %v1099
      %v1205 = vpack.c.b16 %v1102, %v1101
      %v1206 = vpack.c.b16 %v1104, %v1103
      %v1207 = vpack.c.b16 %v1106, %v1105
      %v1208 = vpack.c.b16 %v1108, %v1107
      %v1209 = vpack.c.b16 %v1110, %v1109
      %v1210 = vpack.c.b16 %v1112, %v1111
      %v1211 = vpack.c.b16 %v1114, %v1113
      %v1212 = vpack.c.b16 %v1116, %v1115
      %v1213 = vpack.c.b16 %v1118, %v1117
      %v1214 = vpack.c.b16 %v1120, %v1119
      %v1215 = vpack.c.b16 %v1122, %v1121
      %v1216 = vpack.c.b16 %v1124, %v1123
      %v1217 = vpack.c.b16 %v1126, %v1125
      %v1218 = vpack.c.b16 %v1128, %v1127
      %v1219 = vpack.c.b16 %v1130, %v1129
      %v1220 = vpack.c.b16 %v1132, %v1131
      %v1221 = vpack.c.b16 %v1134, %v1133
      %v1222 = vpack.c.b16 %v1136, %v1135
      %v1223 = vpack.c.b16 %v1138, %v1137
      %v1224 = vpack.c.b16 %v1140, %v1139
      %v1225 = vpack.c.b16 %v1142, %v1141
      %v1226 = vpack.c.b16 %v1144, %v1143
      %v1227 = vpack.c.b16 %v1146, %v1145
      %v1228 = vpack.c.b16 %v1148, %v1147
      %v1229 = vpack.c.b16 %v1150, %v1149
      %v1230 = vpack.c.b16 %v1152, %v1151
      %v1231 = vpack.c.b16 %v1154, %v1153
      %v1232 = vpack.c.b16 %v1156, %v1155
      %v1233 = vpack.c.b16 %v1158, %v1157
      %v1234 = vpack.c.b16 %v1160, %v1159
      %v1235 = vpack.c.b16 %v1162, %v1161
      %v1236 = vpack.c.b16 %v1164, %v1163
      %v1237 = vpack.c.b16 %v1166, %v1165
      %v1238 = vpack.c.b16 %v1168, %v1167
      %v1239 = vpack.c.b16 %v1170, %v1169
      %v1240 = vpack.c.b16 %v1172, %v1171
      %v1241 = vpack.c.b16 %v1174, %v1173
      %v1242 = vpack.c.b16 %v1176, %v1175
      %v1243 = vpack.c.b16 %v1178, %v1177
      %v1244 = vpack.c.b16 %v1180, %v1179
      %v1245 = vpack.c.b16 %v1182, %v1181
      %v1246 = vpack.c.b16 %v1184, %v1183
      %v1247 = vpack.c.b16 %v1186, %v1185
      %v1248 = vpack.c.b16 %v1188, %v1187
      %v1249 = vpack.c.b16 %v1190, %v1189
      %v1250 = vpack.c.b16 %v1192, %v1191
      %v1251 = vpack.c.b16 %v1194, %v1193
      %v1252 = vpack.c.b16 %v1196, %v1195
      %v1253 = vpack.c.b16 %v1198, %v1197
      %v1254 = vpack.c.b16 %v1200, %v1199
      %vm1309 = vcmask 785408
      %v1311 = vsel %vm1309, %v783, 0
      %v1314 = vsel %vm1309, %v790, 0
      %v1317 = vsel %vm1309, %v797, 0
      %v1320 = vsel %vm1309, %v804, 0
      %v1323 = vsel %vm1309, %v811, 0
      %v1326 = vsel %vm1309, %v818, 0
      %v1329 = vsel %vm1309, %v825, 0
      %v1332 = vsel %vm1309, %v832, 0
      %v1335 = vsel %vm1309, %v839, 0
      %v1338 = vsel %vm1309, %v846, 0
      %v1341 = vsel %vm1309, %v853, 0
      %v1344 = vsel %vm1309, %v860, 0
      %v1347 = vsel %vm1309, %v867, 0
      %v1350 = vsel %vm1309, %v874, 0
      %v1353 = vsel %vm1309, %v881, 0
      %v1356 = vsel %vm1309, %v888, 0
      %1358 = vmatprep.subr.bf16.mxu0 0
      %1359 = vmatpush1.bf16.msra.mxu0 %v1201
      %1360 = vmatprep.subr.bf16.mxu0 0
      %1361 = vmatpush1.bf16.msra.mxu0 %v1202
      %1362 = vmatprep.subr.bf16.mxu0 0
      %1363 = vmatpush1.bf16.msra.mxu0 %v1203
      %1364 = vmatprep.subr.bf16.mxu0 0
      %1365 = vmatpush1.bf16.msra.mxu0 %v1204
      %1366 = vmatprep.subr.bf16.mxu0 0
      %1367 = vmatpush1.bf16.msra.mxu0 %v1205
      %1368 = vmatprep.subr.bf16.mxu0 0
      %1369 = vmatpush1.bf16.msra.mxu0 %v1206
      %1370 = vmatprep.subr.bf16.mxu0 0
      %1371 = vmatpush1.bf16.msra.mxu0 %v1207
      %1372 = vmatprep.subr.bf16.mxu0 0
      %1373 = vmatpush1.bf16.msra.mxu0 %v1208
      %1374 = vmatprep.subr.bf16.mxu0 0
      %1375 = vmatpush1.bf16.msra.mxu0 %v1209
      %1376 = vmatprep.subr.bf16.mxu0 0
      %1377 = vmatpush1.bf16.msra.mxu0 %v1210
      %1378 = vmatprep.subr.bf16.mxu0 0
      %1379 = vmatpush1.bf16.msra.mxu0 %v1211
      %1380 = vmatprep.subr.bf16.mxu0 0
      %1381 = vmatpush1.bf16.msra.mxu0 %v1212
      %1382 = vmatprep.subr.bf16.mxu0 0
      %1383 = vmatpush1.bf16.msra.mxu0 %v1213
      %1384 = vmatprep.subr.bf16.mxu0 0
      %1385 = vmatpush1.bf16.msra.mxu0 %v1214
      %1386 = vmatprep.subr.bf16.mxu0 0
      %1387 = vmatpush1.bf16.msra.mxu0 %v1215
      %1388 = vmatprep.subr.bf16.mxu0 0
      %1389 = vmatpush1.bf16.msra.mxu0 %v1216
      %1390 = vmatprep.mubr.bf16.mxu0 %v778
      %1391 = vmatmul.mubr.bf16.gmra.mrb[0].mxu0 %v777
      %v1392 = vpop.f32.mrb[0].mxu0
      %v1393 = vadd.f32 0.0, %v1392
      %v1394 = vpop.f32.mrb[0].mxu0
      %v1395 = vpop.f32.mrb[0].mxu0
      %v1396 = vadd.f32 0.0, %v1395
      %v1397 = vpop.f32.mrb[0].mxu0
      %1398 = vmatprep.mubr.bf16.mxu0 %v785
      %1399 = vmatmul.mubr.bf16.gmra.mrb[0].mxu0 %v784
      %v1400 = vpop.f32.mrb[0].mxu0
      %v1401 = vadd.f32 0.0, %v1400
      %v1402 = vpop.f32.mrb[0].mxu0
      %v1403 = vpop.f32.mrb[0].mxu0
      %v1404 = vadd.f32 0.0, %v1403
      %v1405 = vpop.f32.mrb[0].mxu0
      %1406 = vmatprep.mubr.bf16.mxu0 %v792
      %1407 = vmatmul.mubr.bf16.gmra.mrb[0].mxu0 %v791
      %v1408 = vpop.f32.mrb[0].mxu0
      %v1409 = vadd.f32 0.0, %v1408
      %v1410 = vpop.f32.mrb[0].mxu0
      %v1411 = vpop.f32.mrb[0].mxu0
      %v1412 = vadd.f32 0.0, %v1411
      %v1413 = vpop.f32.mrb[0].mxu0
      %1414 = vmatprep.mubr.bf16.mxu0 %v799
      %1415 = vmatmul.mubr.bf16.gmra.mrb[0].mxu0 %v798
      %v1416 = vpop.f32.mrb[0].mxu0
      %v1417 = vadd.f32 0.0, %v1416
      %v1418 = vpop.f32.mrb[0].mxu0
      %v1419 = vpop.f32.mrb[0].mxu0
      %v1420 = vadd.f32 0.0, %v1419
      %v1421 = vpop.f32.mrb[0].mxu0
      %1422 = vmatprep.mubr.bf16.mxu0 %v806
      %1423 = vmatmul.mubr.bf16.gmra.mrb[0].mxu0 %v805
      %v1424 = vpop.f32.mrb[0].mxu0
      %v1425 = vadd.f32 0.0, %v1424
      %v1426 = vpop.f32.mrb[0].mxu0
      %v1427 = vpop.f32.mrb[0].mxu0
      %v1428 = vadd.f32 0.0, %v1427
      %v1429 = vpop.f32.mrb[0].mxu0
      %1430 = vmatprep.mubr.bf16.mxu0 %v813
      %1431 = vmatmul.mubr.bf16.gmra.mrb[0].mxu0 %v812
      %v1432 = vpop.f32.mrb[0].mxu0
      %v1433 = vadd.f32 0.0, %v1432
      %v1434 = vpop.f32.mrb[0].mxu0
      %v1435 = vpop.f32.mrb[0].mxu0
      %v1436 = vadd.f32 0.0, %v1435
      %v1437 = vpop.f32.mrb[0].mxu0
      %1438 = vmatprep.mubr.bf16.mxu0 %v820
      %1439 = vmatmul.mubr.bf16.gmra.mrb[0].mxu0 %v819
      %v1440 = vpop.f32.mrb[0].mxu0
      %v1441 = vadd.f32 0.0, %v1440
      %v1442 = vpop.f32.mrb[0].mxu0
      %v1443 = vpop.f32.mrb[0].mxu0
      %v1444 = vadd.f32 0.0, %v1443
      %v1445 = vpop.f32.mrb[0].mxu0
      %1446 = vmatprep.mubr.bf16.mxu0 %v827
      %1447 = vmatmul.mubr.bf16.gmra.mrb[0].mxu0 %v826
      %v1448 = vpop.f32.mrb[0].mxu0
      %v1449 = vadd.f32 0.0, %v1448
      %v1450 = vpop.f32.mrb[0].mxu0
      %v1451 = vpop.f32.mrb[0].mxu0
      %v1452 = vadd.f32 0.0, %v1451
      %v1453 = vpop.f32.mrb[0].mxu0
      %1454 = vmatprep.mubr.bf16.mxu0 %v834
      %1455 = vmatmul.mubr.bf16.gmra.mrb[0].mxu0 %v833
      %v1456 = vpop.f32.mrb[0].mxu0
      %v1457 = vadd.f32 0.0, %v1456
      %v1458 = vpop.f32.mrb[0].mxu0
      %v1459 = vpop.f32.mrb[0].mxu0
      %v1460 = vadd.f32 0.0, %v1459
      %v1461 = vpop.f32.mrb[0].mxu0
      %1462 = vmatprep.mubr.bf16.mxu0 %v841
      %1463 = vmatmul.mubr.bf16.gmra.mrb[0].mxu0 %v840
      %v1464 = vpop.f32.mrb[0].mxu0
      %v1465 = vadd.f32 0.0, %v1464
      %v1466 = vpop.f32.mrb[0].mxu0
      %v1467 = vpop.f32.mrb[0].mxu0
      %v1468 = vadd.f32 0.0, %v1467
      %v1469 = vpop.f32.mrb[0].mxu0
      %1470 = vmatprep.mubr.bf16.mxu0 %v848
      %1471 = vmatmul.mubr.bf16.gmra.mrb[0].mxu0 %v847
      %v1472 = vpop.f32.mrb[0].mxu0
      %v1473 = vadd.f32 0.0, %v1472
      %v1474 = vpop.f32.mrb[0].mxu0
      %v1475 = vpop.f32.mrb[0].mxu0
      %v1476 = vadd.f32 0.0, %v1475
      %v1477 = vpop.f32.mrb[0].mxu0
      %1478 = vmatprep.mubr.bf16.mxu0 %v855
      %1479 = vmatmul.mubr.bf16.gmra.mrb[0].mxu0 %v854
      %v1480 = vpop.f32.mrb[0].mxu0
      %v1481 = vadd.f32 0.0, %v1480
      %v1482 = vpop.f32.mrb[0].mxu0
      %v1483 = vpop.f32.mrb[0].mxu0
      %v1484 = vadd.f32 0.0, %v1483
      %v1485 = vpop.f32.mrb[0].mxu0
      %1486 = vmatprep.mubr.bf16.mxu0 %v862
      %1487 = vmatmul.mubr.bf16.gmra.mrb[0].mxu0 %v861
      %v1488 = vpop.f32.mrb[0].mxu0
      %v1489 = vadd.f32 0.0, %v1488
      %v1490 = vpop.f32.mrb[0].mxu0
      %v1491 = vpop.f32.mrb[0].mxu0
      %v1492 = vadd.f32 0.0, %v1491
      %v1493 = vpop.f32.mrb[0].mxu0
      %1494 = vmatprep.mubr.bf16.mxu0 %v869
      %1495 = vmatmul.mubr.bf16.gmra.mrb[0].mxu0 %v868
      %v1496 = vpop.f32.mrb[0].mxu0
      %v1497 = vadd.f32 0.0, %v1496
      %v1498 = vpop.f32.mrb[0].mxu0
      %v1499 = vpop.f32.mrb[0].mxu0
      %v1500 = vadd.f32 0.0, %v1499
      %v1501 = vpop.f32.mrb[0].mxu0
      %1502 = vmatprep.mubr.bf16.mxu0 %v876
      %1503 = vmatmul.mubr.bf16.gmra.mrb[0].mxu0 %v875
      %v1504 = vpop.f32.mrb[0].mxu0
      %v1505 = vadd.f32 0.0, %v1504
      %v1506 = vpop.f32.mrb[0].mxu0
      %v1507 = vpop.f32.mrb[0].mxu0
      %v1508 = vadd.f32 0.0, %v1507
      %v1509 = vpop.f32.mrb[0].mxu0
      %1510 = vmatprep.mubr.bf16.mxu0 %v883
      %1511 = vmatmul.mubr.bf16.gmra.mrb[0].mxu0 %v882
      %v1512 = vpop.f32.mrb[0].mxu0
      %v1513 = vadd.f32 0.0, %v1512
      %v1514 = vpop.f32.mrb[0].mxu0
      %v1515 = vpop.f32.mrb[0].mxu0
      %v1516 = vadd.f32 0.0, %v1515
      %v1517 = vpop.f32.mrb[0].mxu0
      %1518 = vdwg.mxu0
      %1519 = vmatprep.subr.bf16.mxu0 0
      %1520 = vmatpush1.bf16.msra.mxu0 %v1217
      %1521 = vmatprep.subr.bf16.mxu0 0
      %1522 = vmatpush1.bf16.msra.mxu0 %v1218
      %1523 = vmatprep.subr.bf16.mxu0 0
      %1524 = vmatpush1.bf16.msra.mxu0 %v1219
      %1525 = vmatprep.subr.bf16.mxu0 0
      %1526 = vmatpush1.bf16.msra.mxu0 %v1220
      %1527 = vmatprep.subr.bf16.mxu0 0
      %1528 = vmatpush1.bf16.msra.mxu0 %v1221
      %1529 = vmatprep.subr.bf16.mxu0 0
      %1530 = vmatpush1.bf16.msra.mxu0 %v1222
      %1531 = vmatprep.subr.bf16.mxu0 0
      %1532 = vmatpush1.bf16.msra.mxu0 %v1223
      %1533 = vmatprep.subr.bf16.mxu0 0
      %1534 = vmatpush1.bf16.msra.mxu0 %v1224
      %1535 = vmatprep.subr.bf16.mxu0 0
      %1536 = vmatpush1.bf16.msra.mxu0 %v1225
      %1537 = vmatprep.subr.bf16.mxu0 0
      %1538 = vmatpush1.bf16.msra.mxu0 %v1226
      %1539 = vmatprep.subr.bf16.mxu0 0
      %1540 = vmatpush1.bf16.msra.mxu0 %v1227
      %1541 = vmatprep.subr.bf16.mxu0 0
      %1542 = vmatpush1.bf16.msra.mxu0 %v1228
      %1543 = vmatprep.subr.bf16.mxu0 0
      %1544 = vmatpush1.bf16.msra.mxu0 %v1229
      %1545 = vmatprep.subr.bf16.mxu0 0
      %1546 = vmatpush1.bf16.msra.mxu0 %v1230
      %1547 = vmatprep.subr.bf16.mxu0 0
      %1548 = vmatpush1.bf16.msra.mxu0 %v1231
      %1549 = vmatprep.subr.bf16.mxu0 0
      %1550 = vmatpush1.bf16.msra.mxu0 %v1232
      %1551 = vmatprep.mubr.bf16.mxu0 %v780
      %1552 = vmatmul.mubr.bf16.gmra.mrb[0].mxu0 %v779
      %v1553 = vpop.f32.mrb[0].mxu0
      %v1554 = vadd.f32 %v1393, %v1553
      %v1555 = vpop.f32.mrb[0].mxu0
      %v1556 = vpop.f32.mrb[0].mxu0
      %v1557 = vadd.f32 %v1396, %v1556
      %v1558 = vpop.f32.mrb[0].mxu0
      %1559 = vmatprep.mubr.bf16.mxu0 %v787
      %1560 = vmatmul.mubr.bf16.gmra.mrb[0].mxu0 %v786
      %v1561 = vpop.f32.mrb[0].mxu0
      %v1562 = vadd.f32 %v1401, %v1561
      %v1563 = vpop.f32.mrb[0].mxu0
      %v1564 = vpop.f32.mrb[0].mxu0
      %v1565 = vadd.f32 %v1404, %v1564
      %v1566 = vpop.f32.mrb[0].mxu0
      %1567 = vmatprep.mubr.bf16.mxu0 %v794
      %1568 = vmatmul.mubr.bf16.gmra.mrb[0].mxu0 %v793
      %v1569 = vpop.f32.mrb[0].mxu0
      %v1570 = vadd.f32 %v1409, %v1569
      %v1571 = vpop.f32.mrb[0].mxu0
      %v1572 = vpop.f32.mrb[0].mxu0
      %v1573 = vadd.f32 %v1412, %v1572
      %v1574 = vpop.f32.mrb[0].mxu0
      %1575 = vmatprep.mubr.bf16.mxu0 %v801
      %1576 = vmatmul.mubr.bf16.gmra.mrb[0].mxu0 %v800
      %v1577 = vpop.f32.mrb[0].mxu0
      %v1578 = vadd.f32 %v1417, %v1577
      %v1579 = vpop.f32.mrb[0].mxu0
      %v1580 = vpop.f32.mrb[0].mxu0
      %v1581 = vadd.f32 %v1420, %v1580
      %v1582 = vpop.f32.mrb[0].mxu0
      %1583 = vmatprep.mubr.bf16.mxu0 %v808
      %1584 = vmatmul.mubr.bf16.gmra.mrb[0].mxu0 %v807
      %v1585 = vpop.f32.mrb[0].mxu0
      %v1586 = vadd.f32 %v1425, %v1585
      %v1587 = vpop.f32.mrb[0].mxu0
      %v1588 = vpop.f32.mrb[0].mxu0
      %v1589 = vadd.f32 %v1428, %v1588
      %v1590 = vpop.f32.mrb[0].mxu0
      %1591 = vmatprep.mubr.bf16.mxu0 %v815
      %1592 = vmatmul.mubr.bf16.gmra.mrb[0].mxu0 %v814
      %v1593 = vpop.f32.mrb[0].mxu0
      %v1594 = vadd.f32 %v1433, %v1593
      %v1595 = vpop.f32.mrb[0].mxu0
      %v1596 = vpop.f32.mrb[0].mxu0
      %v1597 = vadd.f32 %v1436, %v1596
      %v1598 = vpop.f32.mrb[0].mxu0
      %1599 = vmatprep.mubr.bf16.mxu0 %v822
      %1600 = vmatmul.mubr.bf16.gmra.mrb[0].mxu0 %v821
      %v1601 = vpop.f32.mrb[0].mxu0
      %v1602 = vadd.f32 %v1441, %v1601
      %v1603 = vpop.f32.mrb[0].mxu0
      %v1604 = vpop.f32.mrb[0].mxu0
      %v1605 = vadd.f32 %v1444, %v1604
      %v1606 = vpop.f32.mrb[0].mxu0
      %1607 = vmatprep.mubr.bf16.mxu0 %v829
      %1608 = vmatmul.mubr.bf16.gmra.mrb[0].mxu0 %v828
      %v1609 = vpop.f32.mrb[0].mxu0
      %v1610 = vadd.f32 %v1449, %v1609
      %v1611 = vpop.f32.mrb[0].mxu0
      %v1612 = vpop.f32.mrb[0].mxu0
      %v1613 = vadd.f32 %v1452, %v1612
      %v1614 = vpop.f32.mrb[0].mxu0
      %1615 = vmatprep.mubr.bf16.mxu0 %v836
      %1616 = vmatmul.mubr.bf16.gmra.mrb[0].mxu0 %v835
      %v1617 = vpop.f32.mrb[0].mxu0
      %v1618 = vadd.f32 %v1457, %v1617
      %v1619 = vpop.f32.mrb[0].mxu0
      %v1620 = vpop.f32.mrb[0].mxu0
      %v1621 = vadd.f32 %v1460, %v1620
      %v1622 = vpop.f32.mrb[0].mxu0
      %1623 = vmatprep.mubr.bf16.mxu0 %v843
      %1624 = vmatmul.mubr.bf16.gmra.mrb[0].mxu0 %v842
      %v1625 = vpop.f32.mrb[0].mxu0
      %v1626 = vadd.f32 %v1465, %v1625
      %v1627 = vpop.f32.mrb[0].mxu0
      %v1628 = vpop.f32.mrb[0].mxu0
      %v1629 = vadd.f32 %v1468, %v1628
      %v1630 = vpop.f32.mrb[0].mxu0
      %1631 = vmatprep.mubr.bf16.mxu0 %v850
      %1632 = vmatmul.mubr.bf16.gmra.mrb[0].mxu0 %v849
      %v1633 = vpop.f32.mrb[0].mxu0
      %v1634 = vadd.f32 %v1473, %v1633
      %v1635 = vpop.f32.mrb[0].mxu0
      %v1636 = vpop.f32.mrb[0].mxu0
      %v1637 = vadd.f32 %v1476, %v1636
      %v1638 = vpop.f32.mrb[0].mxu0
      %1639 = vmatprep.mubr.bf16.mxu0 %v857
      %1640 = vmatmul.mubr.bf16.gmra.mrb[0].mxu0 %v856
      %v1641 = vpop.f32.mrb[0].mxu0
      %v1642 = vadd.f32 %v1481, %v1641
      %v1643 = vpop.f32.mrb[0].mxu0
      %v1644 = vpop.f32.mrb[0].mxu0
      %v1645 = vadd.f32 %v1484, %v1644
      %v1646 = vpop.f32.mrb[0].mxu0
      %1647 = vmatprep.mubr.bf16.mxu0 %v864
      %1648 = vmatmul.mubr.bf16.gmra.mrb[0].mxu0 %v863
      %v1649 = vpop.f32.mrb[0].mxu0
      %v1650 = vadd.f32 %v1489, %v1649
      %v1651 = vpop.f32.mrb[0].mxu0
      %v1652 = vpop.f32.mrb[0].mxu0
      %v1653 = vadd.f32 %v1492, %v1652
      %v1654 = vpop.f32.mrb[0].mxu0
      %1655 = vmatprep.mubr.bf16.mxu0 %v871
      %1656 = vmatmul.mubr.bf16.gmra.mrb[0].mxu0 %v870
      %v1657 = vpop.f32.mrb[0].mxu0
      %v1658 = vadd.f32 %v1497, %v1657
      %v1659 = vpop.f32.mrb[0].mxu0
      %v1660 = vpop.f32.mrb[0].mxu0
      %v1661 = vadd.f32 %v1500, %v1660
      %v1662 = vpop.f32.mrb[0].mxu0
      %1663 = vmatprep.mubr.bf16.mxu0 %v878
      %1664 = vmatmul.mubr.bf16.gmra.mrb[0].mxu0 %v877
      %v1665 = vpop.f32.mrb[0].mxu0
      %v1666 = vadd.f32 %v1505, %v1665
      %v1667 = vpop.f32.mrb[0].mxu0
      %v1668 = vpop.f32.mrb[0].mxu0
      %v1669 = vadd.f32 %v1508, %v1668
      %v1670 = vpop.f32.mrb[0].mxu0
      %1671 = vmatprep.mubr.bf16.mxu0 %v885
      %1672 = vmatmul.mubr.bf16.gmra.mrb[0].mxu0 %v884
      %v1673 = vpop.f32.mrb[0].mxu0
      %v1674 = vadd.f32 %v1513, %v1673
      %v1675 = vpop.f32.mrb[0].mxu0
      %v1676 = vpop.f32.mrb[0].mxu0
      %v1677 = vadd.f32 %v1516, %v1676
      %v1678 = vpop.f32.mrb[0].mxu0
      %1679 = vdwg.mxu0
      %1680 = vmatprep.subr.bf16.mxu0 0
      %1681 = vmatpush1.bf16.msra.mxu0 %v1233
      %1682 = vmatprep.subr.bf16.mxu0 0
      %1683 = vmatpush1.bf16.msra.mxu0 %v1234
      %1684 = vmatprep.subr.bf16.mxu0 0
      %1685 = vmatpush1.bf16.msra.mxu0 %v1235
      %1686 = vmatprep.subr.bf16.mxu0 0
      %1687 = vmatpush1.bf16.msra.mxu0 %v1236
      %1688 = vmatprep.subr.bf16.mxu0 0
      %1689 = vmatpush1.bf16.msra.mxu0 %v1237
      %1690 = vmatprep.subr.bf16.mxu0 0
      %1691 = vmatpush1.bf16.msra.mxu0 %v1238
      %1692 = vmatprep.subr.bf16.mxu0 0
      %1693 = vmatpush1.bf16.msra.mxu0 %v1239
      %1694 = vmatprep.subr.bf16.mxu0 0
      %1695 = vmatpush1.bf16.msra.mxu0 %v1240
      %1696 = vmatprep.subr.bf16.mxu0 0
      %1697 = vmatpush1.bf16.msra.mxu0 %v1241
      %1698 = vmatprep.subr.bf16.mxu0 0
      %1699 = vmatpush1.bf16.msra.mxu0 %v1242
      %1700 = vmatprep.subr.bf16.mxu0 0
      %1701 = vmatpush1.bf16.msra.mxu0 %v1243
      %1702 = vmatprep.subr.bf16.mxu0 0
      %1703 = vmatpush1.bf16.msra.mxu0 %v1244
      %1704 = vmatprep.subr.bf16.mxu0 0
      %1705 = vmatpush1.bf16.msra.mxu0 %v1245
      %1706 = vmatprep.subr.bf16.mxu0 0
      %1707 = vmatpush1.bf16.msra.mxu0 %v1246
      %1708 = vmatprep.subr.bf16.mxu0 0
      %1709 = vmatpush1.bf16.msra.mxu0 %v1247
      %1710 = vmatprep.subr.bf16.mxu0 0
      %1711 = vmatpush1.bf16.msra.mxu0 %v1248
      %1712 = vmatprep.mubr.bf16.mxu0 %v782
      %1713 = vmatmul.mubr.bf16.gmra.mrb[0].mxu0 %v781
      %v1714 = vpop.f32.mrb[0].mxu0
      %v1715 = vadd.f32 %v1554, %v1714
      %v1716 = vpop.f32.mrb[0].mxu0
      %v1717 = vpop.f32.mrb[0].mxu0
      %v1718 = vadd.f32 %v1557, %v1717
      %v1719 = vpop.f32.mrb[0].mxu0
      %1720 = vmatprep.mubr.bf16.mxu0 %v789
      %1721 = vmatmul.mubr.bf16.gmra.mrb[0].mxu0 %v788
      %v1722 = vpop.f32.mrb[0].mxu0
      %v1723 = vadd.f32 %v1562, %v1722
      %v1724 = vpop.f32.mrb[0].mxu0
      %v1725 = vpop.f32.mrb[0].mxu0
      %v1726 = vadd.f32 %v1565, %v1725
      %v1727 = vpop.f32.mrb[0].mxu0
      %1728 = vmatprep.mubr.bf16.mxu0 %v796
      %1729 = vmatmul.mubr.bf16.gmra.mrb[0].mxu0 %v795
      %v1730 = vpop.f32.mrb[0].mxu0
      %v1731 = vadd.f32 %v1570, %v1730
      %v1732 = vpop.f32.mrb[0].mxu0
      %v1733 = vpop.f32.mrb[0].mxu0
      %v1734 = vadd.f32 %v1573, %v1733
      %v1735 = vpop.f32.mrb[0].mxu0
      %1736 = vmatprep.mubr.bf16.mxu0 %v803
      %1737 = vmatmul.mubr.bf16.gmra.mrb[0].mxu0 %v802
      %v1738 = vpop.f32.mrb[0].mxu0
      %v1739 = vadd.f32 %v1578, %v1738
      %v1740 = vpop.f32.mrb[0].mxu0
      %v1741 = vpop.f32.mrb[0].mxu0
      %v1742 = vadd.f32 %v1581, %v1741
      %v1743 = vpop.f32.mrb[0].mxu0
      %1744 = vmatprep.mubr.bf16.mxu0 %v810
      %1745 = vmatmul.mubr.bf16.gmra.mrb[0].mxu0 %v809
      %v1746 = vpop.f32.mrb[0].mxu0
      %v1747 = vadd.f32 %v1586, %v1746
      %v1748 = vpop.f32.mrb[0].mxu0
      %v1749 = vpop.f32.mrb[0].mxu0
      %v1750 = vadd.f32 %v1589, %v1749
      %v1751 = vpop.f32.mrb[0].mxu0
      %1752 = vmatprep.mubr.bf16.mxu0 %v817
      %1753 = vmatmul.mubr.bf16.gmra.mrb[0].mxu0 %v816
      %v1754 = vpop.f32.mrb[0].mxu0
      %v1755 = vadd.f32 %v1594, %v1754
      %v1756 = vpop.f32.mrb[0].mxu0
      %v1757 = vpop.f32.mrb[0].mxu0
      %v1758 = vadd.f32 %v1597, %v1757
      %v1759 = vpop.f32.mrb[0].mxu0
      %1760 = vmatprep.mubr.bf16.mxu0 %v824
      %1761 = vmatmul.mubr.bf16.gmra.mrb[0].mxu0 %v823
      %v1762 = vpop.f32.mrb[0].mxu0
      %v1763 = vadd.f32 %v1602, %v1762
      %v1764 = vpop.f32.mrb[0].mxu0
      %v1765 = vpop.f32.mrb[0].mxu0
      %v1766 = vadd.f32 %v1605, %v1765
      %v1767 = vpop.f32.mrb[0].mxu0
      %1768 = vmatprep.mubr.bf16.mxu0 %v831
      %1769 = vmatmul.mubr.bf16.gmra.mrb[0].mxu0 %v830
      %v1770 = vpop.f32.mrb[0].mxu0
      %v1771 = vadd.f32 %v1610, %v1770
      %v1772 = vpop.f32.mrb[0].mxu0
      %v1773 = vpop.f32.mrb[0].mxu0
      %v1774 = vadd.f32 %v1613, %v1773
      %v1775 = vpop.f32.mrb[0].mxu0
      %1776 = vmatprep.mubr.bf16.mxu0 %v838
      %1777 = vmatmul.mubr.bf16.gmra.mrb[0].mxu0 %v837
      %v1778 = vpop.f32.mrb[0].mxu0
      %v1779 = vadd.f32 %v1618, %v1778
      %v1780 = vpop.f32.mrb[0].mxu0
      %v1781 = vpop.f32.mrb[0].mxu0
      %v1782 = vadd.f32 %v1621, %v1781
      %v1783 = vpop.f32.mrb[0].mxu0
      %1784 = vmatprep.mubr.bf16.mxu0 %v845
      %1785 = vmatmul.mubr.bf16.gmra.mrb[0].mxu0 %v844
      %v1786 = vpop.f32.mrb[0].mxu0
      %v1787 = vadd.f32 %v1626, %v1786
      %v1788 = vpop.f32.mrb[0].mxu0
      %v1789 = vpop.f32.mrb[0].mxu0
      %v1790 = vadd.f32 %v1629, %v1789
      %v1791 = vpop.f32.mrb[0].mxu0
      %1792 = vmatprep.mubr.bf16.mxu0 %v852
      %1793 = vmatmul.mubr.bf16.gmra.mrb[0].mxu0 %v851
      %v1794 = vpop.f32.mrb[0].mxu0
      %v1795 = vadd.f32 %v1634, %v1794
      %v1796 = vpop.f32.mrb[0].mxu0
      %v1797 = vpop.f32.mrb[0].mxu0
      %v1798 = vadd.f32 %v1637, %v1797
      %v1799 = vpop.f32.mrb[0].mxu0
      %1800 = vmatprep.mubr.bf16.mxu0 %v859
      %1801 = vmatmul.mubr.bf16.gmra.mrb[0].mxu0 %v858
      %v1802 = vpop.f32.mrb[0].mxu0
      %v1803 = vadd.f32 %v1642, %v1802
      %v1804 = vpop.f32.mrb[0].mxu0
      %v1805 = vpop.f32.mrb[0].mxu0
      %v1806 = vadd.f32 %v1645, %v1805
      %v1807 = vpop.f32.mrb[0].mxu0
      %1808 = vmatprep.mubr.bf16.mxu0 %v866
      %1809 = vmatmul.mubr.bf16.gmra.mrb[0].mxu0 %v865
      %v1810 = vpop.f32.mrb[0].mxu0
      %v1811 = vadd.f32 %v1650, %v1810
      %v1812 = vpop.f32.mrb[0].mxu0
      %v1813 = vpop.f32.mrb[0].mxu0
      %v1814 = vadd.f32 %v1653, %v1813
      %v1815 = vpop.f32.mrb[0].mxu0
      %1816 = vmatprep.mubr.bf16.mxu0 %v873
      %1817 = vmatmul.mubr.bf16.gmra.mrb[0].mxu0 %v872
      %v1818 = vpop.f32.mrb[0].mxu0
      %v1819 = vadd.f32 %v1658, %v1818
      %v1820 = vpop.f32.mrb[0].mxu0
      %v1821 = vpop.f32.mrb[0].mxu0
      %v1822 = vadd.f32 %v1661, %v1821
      %v1823 = vpop.f32.mrb[0].mxu0
      %1824 = vmatprep.mubr.bf16.mxu0 %v880
      %1825 = vmatmul.mubr.bf16.gmra.mrb[0].mxu0 %v879
      %v1826 = vpop.f32.mrb[0].mxu0
      %v1827 = vadd.f32 %v1666, %v1826
      %v1828 = vpop.f32.mrb[0].mxu0
      %v1829 = vpop.f32.mrb[0].mxu0
      %v1830 = vadd.f32 %v1669, %v1829
      %v1831 = vpop.f32.mrb[0].mxu0
      %1832 = vmatprep.mubr.bf16.mxu0 %v887
      %1833 = vmatmul.mubr.bf16.gmra.mrb[0].mxu0 %v886
      %v1834 = vpop.f32.mrb[0].mxu0
      %v1835 = vadd.f32 %v1674, %v1834
      %v1836 = vpop.f32.mrb[0].mxu0
      %v1837 = vpop.f32.mrb[0].mxu0
      %v1838 = vadd.f32 %v1677, %v1837
      %v1839 = vpop.f32.mrb[0].mxu0
      %1840 = vdwg.mxu0
      %1841 = vmatprep.subr.bf16.mxu0 0
      %1842 = vmatpush1.bf16.msra.mxu0 %v1249
      %1843 = vmatprep.subr.bf16.mxu0 0
      %1844 = vmatpush1.bf16.msra.mxu0 %v1250
      %1845 = vmatprep.subr.bf16.mxu0 0
      %1846 = vmatpush1.bf16.msra.mxu0 %v1251
      %1847 = vmatprep.subr.bf16.mxu0 0
      %1848 = vmatpush1.bf16.msra.mxu0 %v1252
      %1849 = vmatprep.subr.bf16.mxu0 0
      %1850 = vmatpush1.bf16.msra.mxu0 %v1253
      %1851 = vmatprep.subr.bf16.mxu0 0
      %1852 = vmatpush1.bf16.msra.mxu0 %v1254
      %1853 = vmatprep.subr.bf16.mxu0 0
      %1854 = vmatpush1.bf16.msra.mxu0 0
      %1855 = vmatprep.subr.bf16.mxu0 0
      %1856 = vmatpush1.bf16.msra.mxu0 0
      %1857 = vmatprep.subr.bf16.mxu0 0
      %1858 = vmatpush1.bf16.msra.mxu0 0
      %1859 = vmatprep.subr.bf16.mxu0 0
      %1860 = vmatpush1.bf16.msra.mxu0 0
      %1861 = vmatprep.subr.bf16.mxu0 0
      %1862 = vmatpush1.bf16.msra.mxu0 0
      %1863 = vmatprep.subr.bf16.mxu0 0
      %1864 = vmatpush1.bf16.msra.mxu0 0
      %1865 = vmatprep.subr.bf16.mxu0 0
      %1866 = vmatpush1.bf16.msra.mxu0 0
      %1867 = vmatprep.subr.bf16.mxu0 0
      %1868 = vmatpush1.bf16.msra.mxu0 0
      %1869 = vmatprep.subr.bf16.mxu0 0
      %1870 = vmatpush1.bf16.msra.mxu0 0
      %1871 = vmatprep.subr.bf16.mxu0 0
      %1872 = vmatpush1.bf16.msra.mxu0 0
      %1873 = vmatprep.mubr.bf16.mxu0 0
      %1874 = vmatmul.mubr.bf16.gmra.mrb[0].mxu0 %v1311
      %v1875 = vpop.f32.mrb[0].mxu0
      %v1876 = vadd.f32 %v1715, %v1875
      %v1877 = vpop.f32.mrb[0].mxu0
      %v1878 = vpop.f32.mrb[0].mxu0
      %v1879 = vadd.f32 %v1718, %v1878
      %v1880 = vpop.f32.mrb[0].mxu0
      %1881 = vmatprep.mubr.bf16.mxu0 0
      %1882 = vmatmul.mubr.bf16.gmra.mrb[0].mxu0 %v1314
      %v1883 = vpop.f32.mrb[0].mxu0
      %v1884 = vadd.f32 %v1723, %v1883
      %v1885 = vpop.f32.mrb[0].mxu0
      %v1886 = vpop.f32.mrb[0].mxu0
      %v1887 = vadd.f32 %v1726, %v1886
      %v1888 = vpop.f32.mrb[0].mxu0
      %1889 = vmatprep.mubr.bf16.mxu0 0
      %1890 = vmatmul.mubr.bf16.gmra.mrb[0].mxu0 %v1317
      %v1891 = vpop.f32.mrb[0].mxu0
      %v1892 = vadd.f32 %v1731, %v1891
      %v1893 = vpop.f32.mrb[0].mxu0
      %v1894 = vpop.f32.mrb[0].mxu0
      %v1895 = vadd.f32 %v1734, %v1894
      %v1896 = vpop.f32.mrb[0].mxu0
      %1897 = vmatprep.mubr.bf16.mxu0 0
      %1898 = vmatmul.mubr.bf16.gmra.mrb[0].mxu0 %v1320
      %v1899 = vpop.f32.mrb[0].mxu0
      %v1900 = vadd.f32 %v1739, %v1899
      %v1901 = vpop.f32.mrb[0].mxu0
      %v1902 = vpop.f32.mrb[0].mxu0
      %v1903 = vadd.f32 %v1742, %v1902
      %v1904 = vpop.f32.mrb[0].mxu0
      %1905 = vmatprep.mubr.bf16.mxu0 0
      %1906 = vmatmul.mubr.bf16.gmra.mrb[0].mxu0 %v1323
      %v1907 = vpop.f32.mrb[0].mxu0
      %v1908 = vadd.f32 %v1747, %v1907
      %v1909 = vpop.f32.mrb[0].mxu0
      %v1910 = vpop.f32.mrb[0].mxu0
      %v1911 = vadd.f32 %v1750, %v1910
      %v1912 = vpop.f32.mrb[0].mxu0
      %1913 = vmatprep.mubr.bf16.mxu0 0
      %1914 = vmatmul.mubr.bf16.gmra.mrb[0].mxu0 %v1326
      %v1915 = vpop.f32.mrb[0].mxu0
      %v1916 = vadd.f32 %v1755, %v1915
      %v1917 = vpop.f32.mrb[0].mxu0
      %v1918 = vpop.f32.mrb[0].mxu0
      %v1919 = vadd.f32 %v1758, %v1918
      %v1920 = vpop.f32.mrb[0].mxu0
      %1921 = vmatprep.mubr.bf16.mxu0 0
      %1922 = vmatmul.mubr.bf16.gmra.mrb[0].mxu0 %v1329
      %v1923 = vpop.f32.mrb[0].mxu0
      %v1924 = vadd.f32 %v1763, %v1923
      %v1925 = vpop.f32.mrb[0].mxu0
      %v1926 = vpop.f32.mrb[0].mxu0
      %v1927 = vadd.f32 %v1766, %v1926
      %v1928 = vpop.f32.mrb[0].mxu0
      %1929 = vmatprep.mubr.bf16.mxu0 0
      %1930 = vmatmul.mubr.bf16.gmra.mrb[0].mxu0 %v1332
      %v1931 = vpop.f32.mrb[0].mxu0
      %v1932 = vadd.f32 %v1771, %v1931
      %v1933 = vpop.f32.mrb[0].mxu0
      %v1934 = vpop.f32.mrb[0].mxu0
      %v1935 = vadd.f32 %v1774, %v1934
      %v1936 = vpop.f32.mrb[0].mxu0
      %1937 = vmatprep.mubr.bf16.mxu0 0
      %1938 = vmatmul.mubr.bf16.gmra.mrb[0].mxu0 %v1335
      %v1939 = vpop.f32.mrb[0].mxu0
      %v1940 = vadd.f32 %v1779, %v1939
      %v1941 = vpop.f32.mrb[0].mxu0
      %v1942 = vpop.f32.mrb[0].mxu0
      %v1943 = vadd.f32 %v1782, %v1942
      %v1944 = vpop.f32.mrb[0].mxu0
      %1945 = vmatprep.mubr.bf16.mxu0 0
      %1946 = vmatmul.mubr.bf16.gmra.mrb[0].mxu0 %v1338
      %v1947 = vpop.f32.mrb[0].mxu0
      %v1948 = vadd.f32 %v1787, %v1947
      %v1949 = vpop.f32.mrb[0].mxu0
      %v1950 = vpop.f32.mrb[0].mxu0
      %v1951 = vadd.f32 %v1790, %v1950
      %v1952 = vpop.f32.mrb[0].mxu0
      %1953 = vmatprep.mubr.bf16.mxu0 0
      %1954 = vmatmul.mubr.bf16.gmra.mrb[0].mxu0 %v1341
      %v1955 = vpop.f32.mrb[0].mxu0
      %v1956 = vadd.f32 %v1795, %v1955
      %v1957 = vpop.f32.mrb[0].mxu0
      %v1958 = vpop.f32.mrb[0].mxu0
      %v1959 = vadd.f32 %v1798, %v1958
      %v1960 = vpop.f32.mrb[0].mxu0
      %1961 = vmatprep.mubr.bf16.mxu0 0
      %1962 = vmatmul.mubr.bf16.gmra.mrb[0].mxu0 %v1344
      %v1963 = vpop.f32.mrb[0].mxu0
      %v1964 = vadd.f32 %v1803, %v1963
      %v1965 = vpop.f32.mrb[0].mxu0
      %v1966 = vpop.f32.mrb[0].mxu0
      %v1967 = vadd.f32 %v1806, %v1966
      %v1968 = vpop.f32.mrb[0].mxu0
      %1969 = vmatprep.mubr.bf16.mxu0 0
      %1970 = vmatmul.mubr.bf16.gmra.mrb[0].mxu0 %v1347
      %v1971 = vpop.f32.mrb[0].mxu0
      %v1972 = vadd.f32 %v1811, %v1971
      %v1973 = vpop.f32.mrb[0].mxu0
      %v1974 = vpop.f32.mrb[0].mxu0
      %v1975 = vadd.f32 %v1814, %v1974
      %v1976 = vpop.f32.mrb[0].mxu0
      %1977 = vmatprep.mubr.bf16.mxu0 0
      %1978 = vmatmul.mubr.bf16.gmra.mrb[0].mxu0 %v1350
      %v1979 = vpop.f32.mrb[0].mxu0
      %v1980 = vadd.f32 %v1819, %v1979
      %v1981 = vpop.f32.mrb[0].mxu0
      %v1982 = vpop.f32.mrb[0].mxu0
      %v1983 = vadd.f32 %v1822, %v1982
      %v1984 = vpop.f32.mrb[0].mxu0
      %1985 = vmatprep.mubr.bf16.mxu0 0
      %1986 = vmatmul.mubr.bf16.gmra.mrb[0].mxu0 %v1353
      %v1987 = vpop.f32.mrb[0].mxu0
      %v1988 = vadd.f32 %v1827, %v1987
      %v1989 = vpop.f32.mrb[0].mxu0
      %v1990 = vpop.f32.mrb[0].mxu0
      %v1991 = vadd.f32 %v1830, %v1990
      %v1992 = vpop.f32.mrb[0].mxu0
      %1993 = vmatprep.mubr.bf16.mxu0 0
      %1994 = vmatmul.mubr.bf16.gmra.mrb[0].mxu0 %v1356
      %v1995 = vpop.f32.mrb[0].mxu0
      %v1996 = vadd.f32 %v1835, %v1995
      %v1997 = vpop.f32.mrb[0].mxu0
      %v1998 = vpop.f32.mrb[0].mxu0
      %v1999 = vadd.f32 %v1838, %v1998
      %v2000 = vpop.f32.mrb[0].mxu0
      %2001 = vdwg.mxu0
      %vm2002 = vcmask 261120
      %v2003 = vsel %vm2002, %v1876, 0.0
      %v2004 = vsel %vm2002, %v1879, 0.0
      %v2005 = vadd.f32 %v2003, %v2004
      %v2006 = vsel %vm2002, %v1884, 0.0
      %v2007 = vadd.f32 %v2005, %v2006
      %v2008 = vsel %vm2002, %v1887, 0.0
      %v2009 = vadd.f32 %v2007, %v2008
      %v2010 = vsel %vm2002, %v1892, 0.0
      %v2011 = vadd.f32 %v2009, %v2010
      %v2012 = vsel %vm2002, %v1895, 0.0
      %v2013 = vadd.f32 %v2011, %v2012
      %v2014 = vsel %vm2002, %v1900, 0.0
      %v2015 = vadd.f32 %v2013, %v2014
      %v2016 = vsel %vm2002, %v1903, 0.0
      %v2017 = vadd.f32 %v2015, %v2016
      %v2018 = vsel %vm2002, %v1908, 0.0
      %v2019 = vadd.f32 %v2017, %v2018
      %v2020 = vsel %vm2002, %v1911, 0.0
      %v2021 = vadd.f32 %v2019, %v2020
      %v2022 = vsel %vm2002, %v1916, 0.0
      %v2023 = vadd.f32 %v2021, %v2022
      %v2024 = vsel %vm2002, %v1919, 0.0
      %v2025 = vadd.f32 %v2023, %v2024
      %v2026 = vsel %vm2002, %v1924, 0.0
      %v2027 = vadd.f32 %v2025, %v2026
      %v2028 = vsel %vm2002, %v1927, 0.0
      %v2029 = vadd.f32 %v2027, %v2028
      %v2030 = vsel %vm2002, %v1932, 0.0
      %v2031 = vadd.f32 %v2029, %v2030
      %v2032 = vsel %vm2002, %v1935, 0.0
      %v2033 = vadd.f32 %v2031, %v2032
      %v2034 = vsel %vm2002, %v1940, 0.0
      %v2035 = vadd.f32 %v2033, %v2034
      %v2036 = vsel %vm2002, %v1943, 0.0
      %v2037 = vadd.f32 %v2035, %v2036
      %v2038 = vsel %vm2002, %v1948, 0.0
      %v2039 = vadd.f32 %v2037, %v2038
      %v2040 = vsel %vm2002, %v1951, 0.0
      %v2041 = vadd.f32 %v2039, %v2040
      %v2042 = vsel %vm2002, %v1956, 0.0
      %v2043 = vadd.f32 %v2041, %v2042
      %v2044 = vsel %vm2002, %v1959, 0.0
      %v2045 = vadd.f32 %v2043, %v2044
      %v2046 = vsel %vm2002, %v1964, 0.0
      %v2047 = vadd.f32 %v2045, %v2046
      %v2048 = vsel %vm2002, %v1967, 0.0
      %v2049 = vadd.f32 %v2047, %v2048
      %v2050 = vsel %vm2002, %v1972, 0.0
      %v2051 = vadd.f32 %v2049, %v2050
      %v2052 = vsel %vm2002, %v1975, 0.0
      %v2053 = vadd.f32 %v2051, %v2052
      %v2054 = vsel %vm2002, %v1980, 0.0
      %v2055 = vadd.f32 %v2053, %v2054
      %v2056 = vsel %vm2002, %v1983, 0.0
      %v2057 = vadd.f32 %v2055, %v2056
      %v2058 = vsel %vm2002, %v1988, 0.0
      %v2059 = vadd.f32 %v2057, %v2058
      %v2060 = vsel %vm2002, %v1991, 0.0
      %v2061 = vadd.f32 %v2059, %v2060
      %v2062 = vsel %vm2002, %v1996, 0.0
      %v2063 = vadd.f32 %v2061, %v2062
      %v2064 = vsel %vm2002, %v1999, 0.0
      %v2065 = vadd.f32 %v2063, %v2064
      %v2066 = vrot.slane %v2065, 4
      %v2067 = vadd.f32 %v2065, %v2066
      %v2068 = vrot.slane %v2067, 2
      %v2069 = vadd.f32 %v2067, %v2068
      %v2070 = vrot.slane %v2069, 1
      %v2071 = vadd.f32 %v2069, %v2070
      %v2072 = vmul.f32 %v1876, %v1876
      %v2073 = vmul.f32 %v1879, %v1879
      %v2074 = vmul.f32 %v1884, %v1884
      %v2075 = vmul.f32 %v1887, %v1887
      %v2076 = vmul.f32 %v1892, %v1892
      %v2077 = vmul.f32 %v1895, %v1895
      %v2078 = vmul.f32 %v1900, %v1900
      %v2079 = vmul.f32 %v1903, %v1903
      %v2080 = vmul.f32 %v1908, %v1908
      %v2081 = vmul.f32 %v1911, %v1911
      %v2082 = vmul.f32 %v1916, %v1916
      %v2083 = vmul.f32 %v1919, %v1919
      %v2084 = vmul.f32 %v1924, %v1924
      %v2085 = vmul.f32 %v1927, %v1927
      %v2086 = vmul.f32 %v1932, %v1932
      %v2087 = vmul.f32 %v1935, %v1935
      %v2088 = vmul.f32 %v1940, %v1940
      %v2089 = vmul.f32 %v1943, %v1943
      %v2090 = vmul.f32 %v1948, %v1948
      %v2091 = vmul.f32 %v1951, %v1951
      %v2092 = vmul.f32 %v1956, %v1956
      %v2093 = vmul.f32 %v1959, %v1959
      %v2094 = vmul.f32 %v1964, %v1964
      %v2095 = vmul.f32 %v1967, %v1967
      %v2096 = vmul.f32 %v1972, %v1972
      %v2097 = vmul.f32 %v1975, %v1975
      %v2098 = vmul.f32 %v1980, %v1980
      %v2099 = vmul.f32 %v1983, %v1983
      %v2100 = vmul.f32 %v1988, %v1988
      %v2101 = vmul.f32 %v1991, %v1991
      %v2102 = vmul.f32 %v1996, %v1996
      %v2103 = vmul.f32 %v1999, %v1999
      %v2104 = vsel %vm2002, %v2072, 0.0
      %v2105 = vsel %vm2002, %v2073, 0.0
      %v2106 = vadd.f32 %v2104, %v2105
      %v2107 = vsel %vm2002, %v2074, 0.0
      %v2108 = vadd.f32 %v2106, %v2107
      %v2109 = vsel %vm2002, %v2075, 0.0
      %v2110 = vadd.f32 %v2108, %v2109
      %v2111 = vsel %vm2002, %v2076, 0.0
      %v2112 = vadd.f32 %v2110, %v2111
      %v2113 = vsel %vm2002, %v2077, 0.0
      %v2114 = vadd.f32 %v2112, %v2113
      %v2115 = vsel %vm2002, %v2078, 0.0
      %v2116 = vadd.f32 %v2114, %v2115
      %v2117 = vsel %vm2002, %v2079, 0.0
      %v2118 = vadd.f32 %v2116, %v2117
      %v2119 = vsel %vm2002, %v2080, 0.0
      %v2120 = vadd.f32 %v2118, %v2119
      %v2121 = vsel %vm2002, %v2081, 0.0
      %v2122 = vadd.f32 %v2120, %v2121
      %v2123 = vsel %vm2002, %v2082, 0.0
      %v2124 = vadd.f32 %v2122, %v2123
      %v2125 = vsel %vm2002, %v2083, 0.0
      %v2126 = vadd.f32 %v2124, %v2125
      %v2127 = vsel %vm2002, %v2084, 0.0
      %v2128 = vadd.f32 %v2126, %v2127
      %v2129 = vsel %vm2002, %v2085, 0.0
      %v2130 = vadd.f32 %v2128, %v2129
      %v2131 = vsel %vm2002, %v2086, 0.0
      %v2132 = vadd.f32 %v2130, %v2131
      %v2133 = vsel %vm2002, %v2087, 0.0
      %v2134 = vadd.f32 %v2132, %v2133
      %v2135 = vsel %vm2002, %v2088, 0.0
      %v2136 = vadd.f32 %v2134, %v2135
      %v2137 = vsel %vm2002, %v2089, 0.0
      %v2138 = vadd.f32 %v2136, %v2137
      %v2139 = vsel %vm2002, %v2090, 0.0
      %v2140 = vadd.f32 %v2138, %v2139
      %v2141 = vsel %vm2002, %v2091, 0.0
      %v2142 = vadd.f32 %v2140, %v2141
      %v2143 = vsel %vm2002, %v2092, 0.0
      %v2144 = vadd.f32 %v2142, %v2143
      %v2145 = vsel %vm2002, %v2093, 0.0
      %v2146 = vadd.f32 %v2144, %v2145
      %v2147 = vsel %vm2002, %v2094, 0.0
      %v2148 = vadd.f32 %v2146, %v2147
      %v2149 = vsel %vm2002, %v2095, 0.0
      %v2150 = vadd.f32 %v2148, %v2149
      %v2151 = vsel %vm2002, %v2096, 0.0
      %v2152 = vadd.f32 %v2150, %v2151
      %v2153 = vsel %vm2002, %v2097, 0.0
      %v2154 = vadd.f32 %v2152, %v2153
      %v2155 = vsel %vm2002, %v2098, 0.0
      %v2156 = vadd.f32 %v2154, %v2155
      %v2157 = vsel %vm2002, %v2099, 0.0
      %v2158 = vadd.f32 %v2156, %v2157
      %v2159 = vsel %vm2002, %v2100, 0.0
      %v2160 = vadd.f32 %v2158, %v2159
      %v2161 = vsel %vm2002, %v2101, 0.0
      %v2162 = vadd.f32 %v2160, %v2161
      %v2163 = vsel %vm2002, %v2102, 0.0
      %v2164 = vadd.f32 %v2162, %v2163
      %v2165 = vsel %vm2002, %v2103, 0.0
      %v2166 = vadd.f32 %v2164, %v2165
      %v2167 = vrot.slane %v2166, 4
      %v2168 = vadd.f32 %v2166, %v2167
      %v2169 = vrot.slane %v2168, 2
      %v2170 = vadd.f32 %v2168, %v2169
      %v2171 = vrot.slane %v2170, 1
      %v2172 = vadd.f32 %v2170, %v2171
      %v2173 = vpack.c.bf16 %v1879, %v1876
      %v2174 = vpack.c.bf16 %v1887, %v1884
      %v2175 = vpack.c.bf16 %v1895, %v1892
      %v2176 = vpack.c.bf16 %v1903, %v1900
      %v2177 = vpack.c.bf16 %v1911, %v1908
      %v2178 = vpack.c.bf16 %v1919, %v1916
      %v2179 = vpack.c.bf16 %v1927, %v1924
      %v2180 = vpack.c.bf16 %v1935, %v1932
      %v2181 = vpack.c.bf16 %v1943, %v1940
      %v2182 = vpack.c.bf16 %v1951, %v1948
      %v2183 = vpack.c.bf16 %v1959, %v1956
      %v2184 = vpack.c.bf16 %v1967, %v1964
      %v2185 = vpack.c.bf16 %v1975, %v1972
      %v2186 = vpack.c.bf16 %v1983, %v1980
      %v2187 = vpack.c.bf16 %v1991, %v1988
      %v2188 = vpack.c.bf16 %v1999, %v1996
      %v2205 = vunpack.c.l.b16 %v2173
      %v2206 = vunpack.c.h.b16 %v2173
      %v2207 = vunpack.c.l.b16 %v2174
      %v2208 = vunpack.c.h.b16 %v2174
      %v2209 = vunpack.c.l.b16 %v2175
      %v2210 = vunpack.c.h.b16 %v2175
      %v2211 = vunpack.c.l.b16 %v2176
      %v2212 = vunpack.c.h.b16 %v2176
      %v2213 = vunpack.c.l.b16 %v2177
      %v2214 = vunpack.c.h.b16 %v2177
      %v2215 = vunpack.c.l.b16 %v2178
      %v2216 = vunpack.c.h.b16 %v2178
      %v2217 = vunpack.c.l.b16 %v2179
      %v2218 = vunpack.c.h.b16 %v2179
      %v2219 = vunpack.c.l.b16 %v2180
      %v2220 = vunpack.c.h.b16 %v2180
      %v2221 = vunpack.c.l.b16 %v2181
      %v2222 = vunpack.c.h.b16 %v2181
      %v2223 = vunpack.c.l.b16 %v2182
      %v2224 = vunpack.c.h.b16 %v2182
      %v2225 = vunpack.c.l.b16 %v2183
      %v2226 = vunpack.c.h.b16 %v2183
      %v2227 = vunpack.c.l.b16 %v2184
      %v2228 = vunpack.c.h.b16 %v2184
      %v2229 = vunpack.c.l.b16 %v2185
      %v2230 = vunpack.c.h.b16 %v2185
      %v2231 = vunpack.c.l.b16 %v2186
      %v2232 = vunpack.c.h.b16 %v2186
      %v2233 = vunpack.c.l.b16 %v2187
      %v2234 = vunpack.c.h.b16 %v2187
      %v2235 = vunpack.c.l.b16 %v2188
      %v2236 = vunpack.c.h.b16 %v2188
      %v2237 = vpack.c.b16 %v2205, %v2205
      %v2238 = vpack.c.b16 %v2206, %v2206
      %v2239 = vpack.c.b16 %v2207, %v2207
      %v2240 = vpack.c.b16 %v2208, %v2208
      %v2241 = vpack.c.b16 %v2209, %v2209
      %v2242 = vpack.c.b16 %v2210, %v2210
      %v2243 = vpack.c.b16 %v2211, %v2211
      %v2244 = vpack.c.b16 %v2212, %v2212
      %v2245 = vpack.c.b16 %v2213, %v2213
      %v2246 = vpack.c.b16 %v2214, %v2214
      %v2247 = vpack.c.b16 %v2215, %v2215
      %v2248 = vpack.c.b16 %v2216, %v2216
      %v2249 = vpack.c.b16 %v2217, %v2217
      %v2250 = vpack.c.b16 %v2218, %v2218
      %v2251 = vpack.c.b16 %v2219, %v2219
      %v2252 = vpack.c.b16 %v2220, %v2220
      %v2253 = vpack.c.b16 %v2221, %v2221
      %v2254 = vpack.c.b16 %v2222, %v2222
      %v2255 = vpack.c.b16 %v2223, %v2223
      %v2256 = vpack.c.b16 %v2224, %v2224
      %v2257 = vpack.c.b16 %v2225, %v2225
      %v2258 = vpack.c.b16 %v2226, %v2226
      %v2259 = vpack.c.b16 %v2227, %v2227
      %v2260 = vpack.c.b16 %v2228, %v2228
      %v2261 = vpack.c.b16 %v2229, %v2229
      %v2262 = vpack.c.b16 %v2230, %v2230
      %v2263 = vpack.c.b16 %v2231, %v2231
      %v2264 = vpack.c.b16 %v2232, %v2232
      %v2265 = vpack.c.b16 %v2233, %v2233
      %v2266 = vpack.c.b16 %v2234, %v2234
      %v2267 = vpack.c.b16 %v2235, %v2235
      %v2268 = vpack.c.b16 %v2236, %v2236
      %vm2301 = vcmask 257024
      %2302 = vst.msk [vmem:[%s182] sm:$0xf] %vm2301, %v2237
      %2303 = vst.msk [vmem:[%s182 + $0x4] sm:$0xf] %vm2301, %v2238
      %2304 = vst.msk [vmem:[%s182 + $0x8] sm:$0xf] %vm2301, %v2239
      %2305 = vst.msk [vmem:[%s182 + $0xc] sm:$0xf] %vm2301, %v2240
      %2306 = vst.msk [vmem:[%s182 + $0x10] sm:$0xf] %vm2301, %v2241
      %2307 = vst.msk [vmem:[%s182 + $0x14] sm:$0xf] %vm2301, %v2242
      %2308 = vst.msk [vmem:[%s182 + $0x18] sm:$0xf] %vm2301, %v2243
      %2309 = vst.msk [vmem:[%s182 + $0x1c] sm:$0xf] %vm2301, %v2244
      %2310 = vst.msk [vmem:[%s182 + $0x20] sm:$0xf] %vm2301, %v2245
      %2311 = vst.msk [vmem:[%s182 + $0x24] sm:$0xf] %vm2301, %v2246
      %2312 = vst.msk [vmem:[%s182 + $0x28] sm:$0xf] %vm2301, %v2247
      %2313 = vst.msk [vmem:[%s182 + $0x2c] sm:$0xf] %vm2301, %v2248
      %2314 = vst.msk [vmem:[%s182 + $0x30] sm:$0xf] %vm2301, %v2249
      %2315 = vst.msk [vmem:[%s182 + $0x34] sm:$0xf] %vm2301, %v2250
      %2316 = vst.msk [vmem:[%s182 + $0x38] sm:$0xf] %vm2301, %v2251
      %2317 = vst.msk [vmem:[%s182 + $0x3c] sm:$0xf] %vm2301, %v2252
      %2318 = vst.msk [vmem:[%s182 + $0x40] sm:$0xf] %vm2301, %v2253
      %2319 = vst.msk [vmem:[%s182 + $0x44] sm:$0xf] %vm2301, %v2254
      %2320 = vst.msk [vmem:[%s182 + $0x48] sm:$0xf] %vm2301, %v2255
      %2321 = vst.msk [vmem:[%s182 + $0x4c] sm:$0xf] %vm2301, %v2256
      %2322 = vst.msk [vmem:[%s182 + $0x50] sm:$0xf] %vm2301, %v2257
      %2323 = vst.msk [vmem:[%s182 + $0x54] sm:$0xf] %vm2301, %v2258
      %2324 = vst.msk [vmem:[%s182 + $0x58] sm:$0xf] %vm2301, %v2259
      %2325 = vst.msk [vmem:[%s182 + $0x5c] sm:$0xf] %vm2301, %v2260
      %2326 = vst.msk [vmem:[%s182 + $0x60] sm:$0xf] %vm2301, %v2261
      %2327 = vst.msk [vmem:[%s182 + $0x64] sm:$0xf] %vm2301, %v2262
      %2328 = vst.msk [vmem:[%s182 + $0x68] sm:$0xf] %vm2301, %v2263
      %2329 = vst.msk [vmem:[%s182 + $0x6c] sm:$0xf] %vm2301, %v2264
      %2330 = vst.msk [vmem:[%s182 + $0x70] sm:$0xf] %vm2301, %v2265
      %2331 = vst.msk [vmem:[%s182 + $0x74] sm:$0xf] %vm2301, %v2266
      %2332 = vst.msk [vmem:[%s182 + $0x78] sm:$0xf] %vm2301, %v2267
      %2333 = vst.msk [vmem:[%s182 + $0x7c] sm:$0xf] %vm2301, %v2268
      %v2334 = vlaneseq
      %v2335 = vshrl.u32 %v2334, 7
      %vm2336 = vcmp.eq.s32.totalorder %v2335, 0
      %vm2337 = vcmp.eq.s32.totalorder %v2335, 1
      %v2338 = vsel %vm2337, %v2172, 0.0
      %v2339 = vsel %vm2336, %v2071, %v2338
      %2340 = vst.msk [vmem:[%s187] sm:$0xff] %vm2002, %v2339
      %s2341 = smul.u32 32, %s15
      %p2342 = scmp.lt.s32.totalorder %s2341, 95
      %s2343 = scalar_select %p2342, %s2341, 95
      %s2344 = smul.addr %s2343, 4
      %s2345 = scalar_lea.vmem %s2, %s2344
      %p2346 = scmp.lt.s32.totalorder %s15, 2
      %s2347 = scalar_select %p2346, %s15, 2
      %s2348 = smul.addr %s2347, 8
      %s2349 = scalar_lea.vmem %s3, %s2348
      // Predicated region
      $region29: #{mink_res_block.4} parent=27 // pred_check
        %p2350 = pneg %p80
      $region30: #{mink_res_block.4} parent=27 // pred_check_branch
        %2352 = sbr.rel (%p2350) target = $region32
      $region31: #{mink_res_block.4} parent=27 // pred_region
        %s2353 = smul.u32 32, %s15
      $region32: #{mink_res_block.4} parent=27 // pred_fallthru
        _
      // Predicated region
      $region33: #{mink_res_block.4} parent=27 // pred_check
        %p2354 = pneg %p106
      $region34: #{mink_res_block.4} parent=27 // pred_check_branch
        %2356 = sbr.rel (%p2354) target = $region36
      $region35: #{mink_res_block.4} parent=27 // pred_region
        _
      $region36: #{mink_res_block.4} parent=27 // pred_fallthru
        _
    $region28: #{mink_res_block.4} parent=5 // pred_fallthru
      _
    %p2357 = scmp.le.s32.totalorder 2, %s10
    // Predicated region
    $region37: #{mink_res_block.4} parent=5 // pred_check
      %p2358 = pneg %p2357
    $region38: #{mink_res_block.4} parent=5 // pred_check_branch
      %2360 = sbr.rel (%p2358) target = $region40
    $region39: #{mink_res_block.4} parent=5 // pred_region
      %s2361 = ssub.s32 %s10, 2
      // Predicated region
      $region41: #{mink_res_block.4} parent=39 // pred_check
        %p2362 = pneg %p86
      $region42: #{mink_res_block.4} parent=39 // pred_check_branch
        %2364 = sbr.rel (%p2362) target = $region44
      $region43: #{mink_res_block.4} parent=39 // pred_region
        %s2365 = smul.u32 32, %s16
        %p2366 = scmp.lt.s32.totalorder %s2365, 95
        %s2367 = scalar_select %p2366, %s2365, 95
        %s2368 = smul.addr %s2367, 4
        %s2369 = scalar_lea.vmem %s2, %s2368
      $region44: #{mink_res_block.4} parent=39 // pred_fallthru
        _
      // Predicated region
      $region45: #{mink_res_block.4} parent=39 // pred_check
        %p2370 = pneg %p112
      $region46: #{mink_res_block.4} parent=39 // pred_check_branch
        %2372 = sbr.rel (%p2370) target = $region48
      $region47: #{mink_res_block.4} parent=39 // pred_region
        %p2373 = scmp.lt.s32.totalorder %s16, 2
        %s2374 = scalar_select %p2373, %s16, 2
        %s2375 = smul.addr %s2374, 8
        %s2376 = scalar_lea.vmem %s3, %s2375
      $region48: #{mink_res_block.4} parent=39 // pred_fallthru
        _
    $region40: #{mink_res_block.4} parent=5 // pred_fallthru
      _
  $region6: #{mink_res_block.4} parent=0 // loop_footer
    %s14 = sadd.s32 1, %s10
  $region7: #{mink_res_block.4} parent=0 // loop_footer_branch
    %9 = sbr.rel target = $region3
  $region8: #{mink_res_block.4} parent=0 // loop_exit
    _

// kernel: mink_res_block.5
$region0: #{mink_res_block.5}
  #allocation0 [shape = 'u32[]', space=smem, size = 0x4, offset = 0x4, fixed_abs, tag = 'smem constant byte address 0x4 - core index']
  #allocation1 [shape = 'u32[144,128]{1,0:T(1,128)}', space=vmem, size = 0x12000, scoped, tag = 'internal scratch']
  %s0 = inlined_call_operand.vmem [shape: bf16[192,128], index: 0, kind: input, shape index: {}]
  %s1 = inlined_call_operand.vmem [shape: f32[1,128], index: 1, kind: input, shape index: {}]
  %s2 = inlined_call_operand.vmem [shape: f32[1,128], index: 2, kind: input, shape index: {}]
  %s3 = inlined_call_operand.vmem [shape: bf16[192,128], index: 3, kind: output, shape index: {}]
  %s4 = sld [smem:[#allocation0]]
  $region45: #{mink_res_block.5} parent=0
    _
  %s6 = ssub.s32 1, %s4
  %s7 = scalar_select 0, %s6, %s4
  loop: start=0, step=1, limit=6
  $region2: #{mink_res_block.5} parent=0 // loop_pre_header
    _
  $region3: #{mink_res_block.5} parent=0 // loop_header
    %s9 = sphi 0, %s13
    %p10 = scmp.ge.s32.totalorder %s9, 6
    %s19 = sphi 0, %s21
    %s22 = sphi 0, %s19
    %s23 = sphi 0, %s22
    %s39 = sphi 0, %s23
    %s43 = sphi 0, %s43
    %s45 = sphi 0, %s43
    %s46 = sphi 0, %s45
    %s60 = sphi 0, %s46
    %s64 = sphi 0, %s64
    %s66 = sphi 0, %s64
    %s67 = sphi 0, %s66
    %s81 = sphi 0, %s67
    %s87 = sphi 0, %s89
    %s90 = sphi 0, %s87
    %s91 = sphi 0, %s90
    %s107 = sphi 0, %s91
  $region4: #{mink_res_block.5} parent=0 // loop_header_branch
    %12 = sbr.rel (%p10) target = $region8
  $region5: #{mink_res_block.5} parent=0 // loop_body
    %s14 = ssub.s32 %s9, 1
    %s15 = ssub.s32 %s9, 2
    %s16 = sadd.s32 %s9, 1
    %s17 = ssub.s32 %s9, %s16
    %p18 = scmp.eq.s32.totalorder %s17, 0
    %s20 = sadd.s32 %s19, 1
    %s21 = scalar_select %p18, %s19, %s20
    %p24 = pneg %p18
    %p25 = scmp.eq.s32.totalorder %s9, 3
    %p26 = por %p24, %p25
    %p27 = scmp.ne.s32.totalorder %s19, %s22
    %p28 = scmp.eq.s32.totalorder %s9, 0
    %p29 = por %p27, %p28
    %p30 = scmp.ne.s32.totalorder %s19, %s22
    %p31 = scmp.eq.s32.totalorder %s14, 3
    %p32 = por %p30, %p31
    %p33 = scmp.ne.s32.totalorder %s22, %s23
    %p34 = scmp.eq.s32.totalorder %s14, 0
    %p35 = por %p33, %p34
    %p36 = scmp.ne.s32.totalorder %s22, %s23
    %p37 = scmp.eq.s32.totalorder %s15, 3
    %p38 = por %p36, %p37
    %p40 = scmp.ne.s32.totalorder %s23, %s39
    %p41 = scmp.eq.s32.totalorder %s15, 0
    %p42 = por %p40, %p41
    %s44 = sadd.s32 %s43, 1
    %p47 = scmp.eq.s32.totalorder %s9, 3
    %p48 = scmp.ne.s32.totalorder %s43, %s45
    %p49 = scmp.eq.s32.totalorder %s9, 0
    %p50 = por %p48, %p49
    %p51 = scmp.ne.s32.totalorder %s43, %s45
    %p52 = scmp.eq.s32.totalorder %s14, 3
    %p53 = por %p51, %p52
    %p54 = scmp.ne.s32.totalorder %s45, %s46
    %p55 = scmp.eq.s32.totalorder %s14, 0
    %p56 = por %p54, %p55
    %p57 = scmp.ne.s32.totalorder %s45, %s46
    %p58 = scmp.eq.s32.totalorder %s15, 3
    %p59 = por %p57, %p58
    %p61 = scmp.ne.s32.totalorder %s46, %s60
    %p62 = scmp.eq.s32.totalorder %s15, 0
    %p63 = por %p61, %p62
    %s65 = sadd.s32 %s64, 1
    %p68 = scmp.eq.s32.totalorder %s9, 3
    %p69 = scmp.ne.s32.totalorder %s64, %s66
    %p70 = scmp.eq.s32.totalorder %s9, 0
    %p71 = por %p69, %p70
    %p72 = scmp.ne.s32.totalorder %s64, %s66
    %p73 = scmp.eq.s32.totalorder %s14, 3
    %p74 = por %p72, %p73
    %p75 = scmp.ne.s32.totalorder %s66, %s67
    %p76 = scmp.eq.s32.totalorder %s14, 0
    %p77 = por %p75, %p76
    %p78 = scmp.ne.s32.totalorder %s66, %s67
    %p79 = scmp.eq.s32.totalorder %s15, 3
    %p80 = por %p78, %p79
    %p82 = scmp.ne.s32.totalorder %s67, %s81
    %p83 = scmp.eq.s32.totalorder %s15, 0
    %p84 = por %p82, %p83
    %s85 = ssub.s32 %s9, %s16
    %p86 = scmp.eq.s32.totalorder %s85, 0
    %s88 = sadd.s32 %s87, 1
    %s89 = scalar_select %p86, %s87, %s88
    %p92 = pneg %p86
    %p93 = scmp.eq.s32.totalorder %s9, 3
    %p94 = por %p92, %p93
    %p95 = scmp.ne.s32.totalorder %s87, %s90
    %p96 = scmp.eq.s32.totalorder %s9, 0
    %p97 = por %p95, %p96
    %p98 = scmp.ne.s32.totalorder %s87, %s90
    %p99 = scmp.eq.s32.totalorder %s14, 3
    %p100 = por %p98, %p99
    %p101 = scmp.ne.s32.totalorder %s90, %s91
    %p102 = scmp.eq.s32.totalorder %s14, 0
    %p103 = por %p101, %p102
    %p104 = scmp.ne.s32.totalorder %s90, %s91
    %p105 = scmp.eq.s32.totalorder %s15, 3
    %p106 = por %p104, %p105
    %p108 = scmp.ne.s32.totalorder %s91, %s107
    %p109 = scmp.eq.s32.totalorder %s15, 0
    %p110 = por %p108, %p109
    %p111 = scmp.le.s32.totalorder 1, %s9
    %p112 = scmp.lt.s32.totalorder %s9, 5
    %p113 = pnand %p111, %p112
    %p114 = pneg %p113
    // Predicated region
    $region9: #{mink_res_block.5} parent=5 // pred_check
      _
    $region10: #{mink_res_block.5} parent=5 // pred_check_branch
      %116 = sbr.rel (%p113) target = $region12
    $region11: #{mink_res_block.5} parent=5 // pred_region
      %s117 = ssub.s32 %s9, 1
      // Predicated region
      $region13: #{mink_res_block.5} parent=11 // pred_check
        %p118 = pneg %p56
      $region14: #{mink_res_block.5} parent=11 // pred_check_branch
        %120 = sbr.rel (%p118) target = $region16
      $region15: #{mink_res_block.5} parent=11 // pred_region
        _
      $region16: #{mink_res_block.5} parent=11 // pred_fallthru
        _
      // Predicated region
      $region17: #{mink_res_block.5} parent=11 // pred_check
        %p121 = pneg %p77
      $region18: #{mink_res_block.5} parent=11 // pred_check_branch
        %123 = sbr.rel (%p121) target = $region20
      $region19: #{mink_res_block.5} parent=11 // pred_region
        _
      $region20: #{mink_res_block.5} parent=11 // pred_fallthru
        _
    $region12: #{mink_res_block.5} parent=5 // pred_fallthru
      _
    %p124 = scmp.lt.s32.totalorder %s9, 4
    // Predicated region
    $region21: #{mink_res_block.5} parent=5 // pred_check
      %p125 = pneg %p124
    $region22: #{mink_res_block.5} parent=5 // pred_check_branch
      %127 = sbr.rel (%p125) target = $region24
    $region23: #{mink_res_block.5} parent=5 // pred_region
      // Predicated region
      $region25: #{mink_res_block.5} parent=23 // pred_check
        %p128 = pneg %p29
      $region26: #{mink_res_block.5} parent=23 // pred_check_branch
        %130 = sbr.rel (%p128) target = $region28
      $region27: #{mink_res_block.5} parent=23 // pred_region
        %s131 = smul.u32 6, %s9
        %p132 = scmp.lt.s32.totalorder %s131, 23
        %s133 = scalar_select %p132, %s131, 23
        %s134 = smul.addr %s133, 4
        %s135 = scalar_lea.vmem %s0, %s134
        %s136 = smul.u32 6, %s9
      $region28: #{mink_res_block.5} parent=23 // pred_fallthru
        _
    $region24: #{mink_res_block.5} parent=5 // pred_fallthru
      _
    %p137 = scmp.le.s32.totalorder 1, %s9
    %p138 = scmp.lt.s32.totalorder %s9, 5
    %p139 = pnand %p137, %p138
    %p140 = pneg %p139
    // Predicated region
    $region29: #{mink_res_block.5} parent=5 // pred_check
      _
    $region30: #{mink_res_block.5} parent=5 // pred_check_branch
      %142 = sbr.rel (%p139) target = $region32
    $region31: #{mink_res_block.5} parent=5 // pred_region
      %s143 = ssub.s32 %s9, 1
      %s144 = smul.u32 6, %s14
      %p145 = scmp.lt.s32.totalorder %s144, 23
      %s146 = scalar_select %p145, %s144, 23
      %s147 = smul.addr %s146, 4
      %s148 = scalar_lea.vmem %s0, %s147
      %p149 = pneg %p35
      %p150 = pneg %p32
      %p151 = pneg %p56
      %p152 = pneg %p53
      %p153 = pneg %p77
      %p154 = pneg %p74
      %p155 = pneg %p103
      %p156 = pneg %p100
      %s157 = smul.u32 6, %s14
      %p158 = scmp.lt.s32.totalorder %s157, 23
      %s159 = scalar_select %p158, %s157, 23
      %s160 = smul.addr %s159, 4
      %s161 = scalar_lea.vmem %s3, %s160
      %s162 = smul.u32 6, %s14
      %p163 = scmp.lt.s32.totalorder %s162, 23
      %s164 = scalar_select %p163, %s162, 23
      %s165 = smul.addr %s164, 4
      %s166 = scalar_lea.vmem %s0, %s165
      %s167 = smul.u32 6, %s14
      %s168 = smul.u32 6, %s14
      %p169 = scmp.lt.s32.totalorder %s168, 23
      %s170 = scalar_select %p169, %s168, 23
      %s171 = smul.addr %s170, 4
      %s172 = scalar_lea.vmem %s3, %s171
      %s173 = smul.u32 6, %s14
      %v174 = vld [vmem:[%s166] sm:$0xf]
      %v175 = vld [vmem:[%s166 + $0x4] sm:$0xf]
      %v176 = vld [vmem:[%s166 + $0x8] sm:$0xf]
      %v177 = vld [vmem:[%s166 + $0xc] sm:$0xf]
      %v178 = vld [vmem:[%s166 + $0x10] sm:$0xf]
      %v179 = vld [vmem:[%s166 + $0x14] sm:$0xf]
      %v180 = vunpack.c.l.bf16 %v174
      %v181 = vunpack.c.l.bf16 %v175
      %v182 = vunpack.c.l.bf16 %v176
      %v183 = vunpack.c.l.bf16 %v177
      %v184 = vunpack.c.l.bf16 %v178
      %v185 = vunpack.c.l.bf16 %v179
      %v186 = vld [vmem:[%s1] sm:$0x1]
      %v188 = vlaneseq
      %v189 = vshrl.u32 %v188, 7
      %v190 = vsub.s32 0, %v189
      %v191 = vrot.slane %v186, %v190
      %v193 = vmul.f32 %v180, %v191
      %v194 = vmul.f32 %v181, %v191
      %v195 = vmul.f32 %v182, %v191
      %v196 = vmul.f32 %v183, %v191
      %v197 = vmul.f32 %v184, %v191
      %v198 = vmul.f32 %v185, %v191
      %v199 = vld [vmem:[%s2] sm:$0x1]
      %v201 = vlaneseq
      %v202 = vshrl.u32 %v201, 7
      %v203 = vsub.s32 0, %v202
      %v204 = vrot.slane %v199, %v203
      %v206 = vadd.f32 %v193, %v204
      %v207 = vadd.f32 %v194, %v204
      %v208 = vadd.f32 %v195, %v204
      %v209 = vadd.f32 %v196, %v204
      %v210 = vadd.f32 %v197, %v204
      %v211 = vadd.f32 %v198, %v204
      %v212 = vmax.f32 %v206, 0.0
      %v213 = vmax.f32 %v207, 0.0
      %v214 = vmax.f32 %v208, 0.0
      %v215 = vmax.f32 %v209, 0.0
      %v216 = vmax.f32 %v210, 0.0
      %v217 = vmax.f32 %v211, 0.0
      %v218 = vpack.c.bf16 %v213, %v212
      %v219 = vpack.c.bf16 %v215, %v214
      %v220 = vpack.c.bf16 %v217, %v216
      %v224 = vunpack.c.l.b16 %v218
      %v225 = vunpack.c.h.b16 %v218
      %v226 = vunpack.c.l.b16 %v219
      %v227 = vunpack.c.h.b16 %v219
      %v228 = vunpack.c.l.b16 %v220
      %v229 = vunpack.c.h.b16 %v220
      %v230 = vpack.c.b16 %v224, %v224
      %v231 = vpack.c.b16 %v225, %v225
      %v232 = vpack.c.b16 %v226, %v226
      %v233 = vpack.c.b16 %v227, %v227
      %v234 = vpack.c.b16 %v228, %v228
      %v235 = vpack.c.b16 %v229, %v229
      %242 = vst [vmem:[%s172] sm:$0xf] %v230
      %243 = vst [vmem:[%s172 + $0x4] sm:$0xf] %v231
      %244 = vst [vmem:[%s172 + $0x8] sm:$0xf] %v232
      %245 = vst [vmem:[%s172 + $0xc] sm:$0xf] %v233
      %246 = vst [vmem:[%s172 + $0x10] sm:$0xf] %v234
      %247 = vst [vmem:[%s172 + $0x14] sm:$0xf] %v235
      %s248 = smul.u32 6, %s14
      %p249 = scmp.lt.s32.totalorder %s248, 23
      %s250 = scalar_select %p249, %s248, 23
      %s251 = smul.addr %s250, 4
      %s252 = scalar_lea.vmem %s3, %s251
      // Predicated region
      $region33: #{mink_res_block.5} parent=31 // pred_check
        %p253 = pneg %p100
      $region34: #{mink_res_block.5} parent=31 // pred_check_branch
        %255 = sbr.rel (%p253) target = $region36
      $region35: #{mink_res_block.5} parent=31 // pred_region
        %s256 = smul.u32 6, %s14
      $region36: #{mink_res_block.5} parent=31 // pred_fallthru
        _
    $region32: #{mink_res_block.5} parent=5 // pred_fallthru
      _
    %p257 = scmp.le.s32.totalorder 2, %s9
    // Predicated region
    $region37: #{mink_res_block.5} parent=5 // pred_check
      %p258 = pneg %p257
    $region38: #{mink_res_block.5} parent=5 // pred_check_branch
      %260 = sbr.rel (%p258) target = $region40
    $region39: #{mink_res_block.5} parent=5 // pred_region
      %s261 = ssub.s32 %s9, 2
      // Predicated region
      $region41: #{mink_res_block.5} parent=39 // pred_check
        %p262 = pneg %p106
      $region42: #{mink_res_block.5} parent=39 // pred_check_branch
        %264 = sbr.rel (%p262) target = $region44
      $region43: #{mink_res_block.5} parent=39 // pred_region
        %s265 = smul.u32 6, %s15
        %p266 = scmp.lt.s32.totalorder %s265, 23
        %s267 = scalar_select %p266, %s265, 23
        %s268 = smul.addr %s267, 4
        %s269 = scalar_lea.vmem %s3, %s268
      $region44: #{mink_res_block.5} parent=39 // pred_fallthru
        _
    $region40: #{mink_res_block.5} parent=5 // pred_fallthru
      _
  $region6: #{mink_res_block.5} parent=0 // loop_footer
    %s13 = sadd.s32 1, %s9
  $region7: #{mink_res_block.5} parent=0 // loop_footer_branch
    %8 = sbr.rel target = $region3
  $region8: #{mink_res_block.5} parent=0 // loop_exit
    _

// kernel: mink_res_block.7
$region0: #{mink_res_block.7}
  #allocation0 [shape = 'u32[]', space=smem, size = 0x4, offset = 0x4, fixed_abs, tag = 'smem constant byte address 0x4 - core index']
  #allocation1 [shape = 'u32[144,128]{1,0:T(1,128)}', space=vmem, size = 0x12000, scoped, tag = 'internal scratch']
  %s0 = inlined_call_operand.vmem [shape: bf16[192,128], index: 0, kind: input, shape index: {}]
  %s1 = inlined_call_operand.vmem [shape: f32[1,128], index: 1, kind: input, shape index: {}]
  %s2 = inlined_call_operand.vmem [shape: f32[1,128], index: 2, kind: input, shape index: {}]
  %s3 = inlined_call_operand.vmem [shape: bf16[192,128], index: 3, kind: input, shape index: {}]
  %s4 = inlined_call_operand.vmem [shape: f32[192,128], index: 4, kind: output, shape index: {}]
  %s5 = sld [smem:[#allocation0]]
  $region49: #{mink_res_block.7} parent=0
    _
  %s7 = ssub.s32 1, %s5
  %s8 = scalar_select 0, %s7, %s5
  loop: start=0, step=1, limit=6
  $region2: #{mink_res_block.7} parent=0 // loop_pre_header
    _
  $region3: #{mink_res_block.7} parent=0 // loop_header
    %s10 = sphi 0, %s14
    %p11 = scmp.ge.s32.totalorder %s10, 6
    %s20 = sphi 0, %s22
    %s23 = sphi 0, %s20
    %s24 = sphi 0, %s23
    %s40 = sphi 0, %s24
    %s44 = sphi 0, %s44
    %s46 = sphi 0, %s44
    %s47 = sphi 0, %s46
    %s61 = sphi 0, %s47
    %s65 = sphi 0, %s65
    %s67 = sphi 0, %s65
    %s68 = sphi 0, %s67
    %s82 = sphi 0, %s68
    %s88 = sphi 0, %s90
    %s91 = sphi 0, %s88
    %s92 = sphi 0, %s91
    %s108 = sphi 0, %s92
    %s114 = sphi 0, %s116
    %s117 = sphi 0, %s114
    %s118 = sphi 0, %s117
    %s134 = sphi 0, %s118
  $region4: #{mink_res_block.7} parent=0 // loop_header_branch
    %13 = sbr.rel (%p11) target = $region8
  $region5: #{mink_res_block.7} parent=0 // loop_body
    %s15 = ssub.s32 %s10, 1
    %s16 = ssub.s32 %s10, 2
    %s17 = sadd.s32 %s10, 1
    %s18 = ssub.s32 %s10, %s17
    %p19 = scmp.eq.s32.totalorder %s18, 0
    %s21 = sadd.s32 %s20, 1
    %s22 = scalar_select %p19, %s20, %s21
    %p25 = pneg %p19
    %p26 = scmp.eq.s32.totalorder %s10, 3
    %p27 = por %p25, %p26
    %p28 = scmp.ne.s32.totalorder %s20, %s23
    %p29 = scmp.eq.s32.totalorder %s10, 0
    %p30 = por %p28, %p29
    %p31 = scmp.ne.s32.totalorder %s20, %s23
    %p32 = scmp.eq.s32.totalorder %s15, 3
    %p33 = por %p31, %p32
    %p34 = scmp.ne.s32.totalorder %s23, %s24
    %p35 = scmp.eq.s32.totalorder %s15, 0
    %p36 = por %p34, %p35
    %p37 = scmp.ne.s32.totalorder %s23, %s24
    %p38 = scmp.eq.s32.totalorder %s16, 3
    %p39 = por %p37, %p38
    %p41 = scmp.ne.s32.totalorder %s24, %s40
    %p42 = scmp.eq.s32.totalorder %s16, 0
    %p43 = por %p41, %p42
    %s45 = sadd.s32 %s44, 1
    %p48 = scmp.eq.s32.totalorder %s10, 3
    %p49 = scmp.ne.s32.totalorder %s44, %s46
    %p50 = scmp.eq.s32.totalorder %s10, 0
    %p51 = por %p49, %p50
    %p52 = scmp.ne.s32.totalorder %s44, %s46
    %p53 = scmp.eq.s32.totalorder %s15, 3
    %p54 = por %p52, %p53
    %p55 = scmp.ne.s32.totalorder %s46, %s47
    %p56 = scmp.eq.s32.totalorder %s15, 0
    %p57 = por %p55, %p56
    %p58 = scmp.ne.s32.totalorder %s46, %s47
    %p59 = scmp.eq.s32.totalorder %s16, 3
    %p60 = por %p58, %p59
    %p62 = scmp.ne.s32.totalorder %s47, %s61
    %p63 = scmp.eq.s32.totalorder %s16, 0
    %p64 = por %p62, %p63
    %s66 = sadd.s32 %s65, 1
    %p69 = scmp.eq.s32.totalorder %s10, 3
    %p70 = scmp.ne.s32.totalorder %s65, %s67
    %p71 = scmp.eq.s32.totalorder %s10, 0
    %p72 = por %p70, %p71
    %p73 = scmp.ne.s32.totalorder %s65, %s67
    %p74 = scmp.eq.s32.totalorder %s15, 3
    %p75 = por %p73, %p74
    %p76 = scmp.ne.s32.totalorder %s67, %s68
    %p77 = scmp.eq.s32.totalorder %s15, 0
    %p78 = por %p76, %p77
    %p79 = scmp.ne.s32.totalorder %s67, %s68
    %p80 = scmp.eq.s32.totalorder %s16, 3
    %p81 = por %p79, %p80
    %p83 = scmp.ne.s32.totalorder %s68, %s82
    %p84 = scmp.eq.s32.totalorder %s16, 0
    %p85 = por %p83, %p84
    %s86 = ssub.s32 %s10, %s17
    %p87 = scmp.eq.s32.totalorder %s86, 0
    %s89 = sadd.s32 %s88, 1
    %s90 = scalar_select %p87, %s88, %s89
    %p93 = pneg %p87
    %p94 = scmp.eq.s32.totalorder %s10, 3
    %p95 = por %p93, %p94
    %p96 = scmp.ne.s32.totalorder %s88, %s91
    %p97 = scmp.eq.s32.totalorder %s10, 0
    %p98 = por %p96, %p97
    %p99 = scmp.ne.s32.totalorder %s88, %s91
    %p100 = scmp.eq.s32.totalorder %s15, 3
    %p101 = por %p99, %p100
    %p102 = scmp.ne.s32.totalorder %s91, %s92
    %p103 = scmp.eq.s32.totalorder %s15, 0
    %p104 = por %p102, %p103
    %p105 = scmp.ne.s32.totalorder %s91, %s92
    %p106 = scmp.eq.s32.totalorder %s16, 3
    %p107 = por %p105, %p106
    %p109 = scmp.ne.s32.totalorder %s92, %s108
    %p110 = scmp.eq.s32.totalorder %s16, 0
    %p111 = por %p109, %p110
    %s112 = ssub.s32 %s10, %s17
    %p113 = scmp.eq.s32.totalorder %s112, 0
    %s115 = sadd.s32 %s114, 1
    %s116 = scalar_select %p113, %s114, %s115
    %p119 = pneg %p113
    %p120 = scmp.eq.s32.totalorder %s10, 3
    %p121 = por %p119, %p120
    %p122 = scmp.ne.s32.totalorder %s114, %s117
    %p123 = scmp.eq.s32.totalorder %s10, 0
    %p124 = por %p122, %p123
    %p125 = scmp.ne.s32.totalorder %s114, %s117
    %p126 = scmp.eq.s32.totalorder %s15, 3
    %p127 = por %p125, %p126
    %p128 = scmp.ne.s32.totalorder %s117, %s118
    %p129 = scmp.eq.s32.totalorder %s15, 0
    %p130 = por %p128, %p129
    %p131 = scmp.ne.s32.totalorder %s117, %s118
    %p132 = scmp.eq.s32.totalorder %s16, 3
    %p133 = por %p131, %p132
    %p135 = scmp.ne.s32.totalorder %s118, %s134
    %p136 = scmp.eq.s32.totalorder %s16, 0
    %p137 = por %p135, %p136
    %p138 = scmp.le.s32.totalorder 1, %s10
    %p139 = scmp.lt.s32.totalorder %s10, 5
    %p140 = pnand %p138, %p139
    %p141 = pneg %p140
    // Predicated region
    $region9: #{mink_res_block.7} parent=5 // pred_check
      _
    $region10: #{mink_res_block.7} parent=5 // pred_check_branch
      %143 = sbr.rel (%p140) target = $region12
    $region11: #{mink_res_block.7} parent=5 // pred_region
      %s144 = ssub.s32 %s10, 1
      // Predicated region
      $region13: #{mink_res_block.7} parent=11 // pred_check
        %p145 = pneg %p57
      $region14: #{mink_res_block.7} parent=11 // pred_check_branch
        %147 = sbr.rel (%p145) target = $region16
      $region15: #{mink_res_block.7} parent=11 // pred_region
        _
      $region16: #{mink_res_block.7} parent=11 // pred_fallthru
        _
      // Predicated region
      $region17: #{mink_res_block.7} parent=11 // pred_check
        %p148 = pneg %p78
      $region18: #{mink_res_block.7} parent=11 // pred_check_branch
        %150 = sbr.rel (%p148) target = $region20
      $region19: #{mink_res_block.7} parent=11 // pred_region
        _
      $region20: #{mink_res_block.7} parent=11 // pred_fallthru
        _
    $region12: #{mink_res_block.7} parent=5 // pred_fallthru
      _
    %p151 = scmp.lt.s32.totalorder %s10, 4
    // Predicated region
    $region21: #{mink_res_block.7} parent=5 // pred_check
      %p152 = pneg %p151
    $region22: #{mink_res_block.7} parent=5 // pred_check_branch
      %154 = sbr.rel (%p152) target = $region24
    $region23: #{mink_res_block.7} parent=5 // pred_region
      // Predicated region
      $region25: #{mink_res_block.7} parent=23 // pred_check
        %p155 = pneg %p30
      $region26: #{mink_res_block.7} parent=23 // pred_check_branch
        %157 = sbr.rel (%p155) target = $region28
      $region27: #{mink_res_block.7} parent=23 // pred_region
        %s158 = smul.u32 6, %s10
        %p159 = scmp.lt.s32.totalorder %s158, 23
        %s160 = scalar_select %p159, %s158, 23
        %s161 = smul.addr %s160, 4
        %s162 = scalar_lea.vmem %s0, %s161
        %s163 = smul.u32 6, %s10
      $region28: #{mink_res_block.7} parent=23 // pred_fallthru
        _
      // Predicated region
      $region29: #{mink_res_block.7} parent=23 // pred_check
        %p164 = pneg %p98
      $region30: #{mink_res_block.7} parent=23 // pred_check_branch
        %166 = sbr.rel (%p164) target = $region32
      $region31: #{mink_res_block.7} parent=23 // pred_region
        %s167 = smul.u32 6, %s10
        %p168 = scmp.lt.s32.totalorder %s167, 23
        %s169 = scalar_select %p168, %s167, 23
        %s170 = smul.addr %s169, 4
        %s171 = scalar_lea.vmem %s3, %s170
        %s172 = smul.u32 6, %s10
      $region32: #{mink_res_block.7} parent=23 // pred_fallthru
        _
    $region24: #{mink_res_block.7} parent=5 // pred_fallthru
      _
    %p173 = scmp.le.s32.totalorder 1, %s10
    %p174 = scmp.lt.s32.totalorder %s10, 5
    %p175 = pnand %p173, %p174
    %p176 = pneg %p175
    // Predicated region
    $region33: #{mink_res_block.7} parent=5 // pred_check
      _
    $region34: #{mink_res_block.7} parent=5 // pred_check_branch
      %178 = sbr.rel (%p175) target = $region36
    $region35: #{mink_res_block.7} parent=5 // pred_region
      %s179 = ssub.s32 %s10, 1
      %s180 = smul.u32 6, %s15
      %p181 = scmp.lt.s32.totalorder %s180, 23
      %s182 = scalar_select %p181, %s180, 23
      %s183 = smul.addr %s182, 4
      %s184 = scalar_lea.vmem %s0, %s183
      %p185 = pneg %p36
      %p186 = pneg %p33
      %p187 = pneg %p57
      %p188 = pneg %p54
      %p189 = pneg %p78
      %p190 = pneg %p75
      %s191 = smul.u32 6, %s15
      %p192 = scmp.lt.s32.totalorder %s191, 23
      %s193 = scalar_select %p192, %s191, 23
      %s194 = smul.addr %s193, 4
      %s195 = scalar_lea.vmem %s3, %s194
      %p196 = pneg %p104
      %p197 = pneg %p101
      %p198 = pneg %p130
      %p199 = pneg %p127
      %s200 = smul.u32 6, %s15
      %p201 = scmp.lt.s32.totalorder %s200, 23
      %s202 = scalar_select %p201, %s200, 23
      %s203 = smul.addr %s202, 8
      %s204 = scalar_lea.vmem %s4, %s203
      %s205 = smul.u32 6, %s15
      %p206 = scmp.lt.s32.totalorder %s205, 23
      %s207 = scalar_select %p206, %s205, 23
      %s208 = smul.addr %s207, 4
      %s209 = scalar_lea.vmem %s0, %s208
      %s210 = smul.u32 6, %s15
      %s211 = smul.u32 6, %s15
      %p212 = scmp.lt.s32.totalorder %s211, 23
      %s213 = scalar_select %p212, %s211, 23
      %s214 = smul.addr %s213, 4
      %s215 = scalar_lea.vmem %s3, %s214
      %s216 = smul.u32 6, %s15
      %s217 = smul.u32 6, %s15
      %p218 = scmp.lt.s32.totalorder %s217, 23
      %s219 = scalar_select %p218, %s217, 23
      %s220 = smul.addr %s219, 8
      %s221 = scalar_lea.vmem %s4, %s220
      %s222 = smul.u32 6, %s15
      %v223 = vld [vmem:[%s209] sm:$0xf]
      %v224 = vld [vmem:[%s209 + $0x4] sm:$0xf]
      %v225 = vld [vmem:[%s209 + $0x8] sm:$0xf]
      %v226 = vld [vmem:[%s209 + $0xc] sm:$0xf]
      %v227 = vld [vmem:[%s209 + $0x10] sm:$0xf]
      %v228 = vld [vmem:[%s209 + $0x14] sm:$0xf]
      %v229 = vunpack.c.l.bf16 %v223
      %v230 = vunpack.c.l.bf16 %v224
      %v231 = vunpack.c.l.bf16 %v225
      %v232 = vunpack.c.l.bf16 %v226
      %v233 = vunpack.c.l.bf16 %v227
      %v234 = vunpack.c.l.bf16 %v228
      %v235 = vld [vmem:[%s215] sm:$0xf]
      %v236 = vld [vmem:[%s215 + $0x4] sm:$0xf]
      %v237 = vld [vmem:[%s215 + $0x8] sm:$0xf]
      %v238 = vld [vmem:[%s215 + $0xc] sm:$0xf]
      %v239 = vld [vmem:[%s215 + $0x10] sm:$0xf]
      %v240 = vld [vmem:[%s215 + $0x14] sm:$0xf]
      %v241 = vunpack.c.l.bf16 %v235
      %v242 = vunpack.c.l.bf16 %v236
      %v243 = vunpack.c.l.bf16 %v237
      %v244 = vunpack.c.l.bf16 %v238
      %v245 = vunpack.c.l.bf16 %v239
      %v246 = vunpack.c.l.bf16 %v240
      %v247 = vld [vmem:[%s1] sm:$0x1]
      %v249 = vlaneseq
      %v250 = vshrl.u32 %v249, 7
      %v251 = vsub.s32 0, %v250
      %v252 = vrot.slane %v247, %v251
      %v254 = vmul.f32 %v229, %v252
      %v255 = vmul.f32 %v230, %v252
      %v256 = vmul.f32 %v231, %v252
      %v257 = vmul.f32 %v232, %v252
      %v258 = vmul.f32 %v233, %v252
      %v259 = vmul.f32 %v234, %v252
      %v260 = vld [vmem:[%s2] sm:$0x1]
      %v262 = vlaneseq
      %v263 = vshrl.u32 %v262, 7
      %v264 = vsub.s32 0, %v263
      %v265 = vrot.slane %v260, %v264
      %v267 = vadd.f32 %v254, %v265
      %v268 = vadd.f32 %v255, %v265
      %v269 = vadd.f32 %v256, %v265
      %v270 = vadd.f32 %v257, %v265
      %v271 = vadd.f32 %v258, %v265
      %v272 = vadd.f32 %v259, %v265
      %v273 = vadd.f32 %v267, %v241
      %v274 = vadd.f32 %v268, %v242
      %v275 = vadd.f32 %v269, %v243
      %v276 = vadd.f32 %v270, %v244
      %v277 = vadd.f32 %v271, %v245
      %v278 = vadd.f32 %v272, %v246
      %v279 = vmax.f32 %v273, 0.0
      %v280 = vmax.f32 %v274, 0.0
      %v281 = vmax.f32 %v275, 0.0
      %v282 = vmax.f32 %v276, 0.0
      %v283 = vmax.f32 %v277, 0.0
      %v284 = vmax.f32 %v278, 0.0
      %285 = vst [vmem:[%s221] sm:$0xff] %v279
      %286 = vst [vmem:[%s221 + $0x8] sm:$0xff] %v280
      %287 = vst [vmem:[%s221 + $0x10] sm:$0xff] %v281
      %288 = vst [vmem:[%s221 + $0x18] sm:$0xff] %v282
      %289 = vst [vmem:[%s221 + $0x20] sm:$0xff] %v283
      %290 = vst [vmem:[%s221 + $0x28] sm:$0xff] %v284
      %s291 = smul.u32 6, %s15
      %p292 = scmp.lt.s32.totalorder %s291, 23
      %s293 = scalar_select %p292, %s291, 23
      %s294 = smul.addr %s293, 8
      %s295 = scalar_lea.vmem %s4, %s294
      // Predicated region
      $region37: #{mink_res_block.7} parent=35 // pred_check
        %p296 = pneg %p127
      $region38: #{mink_res_block.7} parent=35 // pred_check_branch
        %298 = sbr.rel (%p296) target = $region40
      $region39: #{mink_res_block.7} parent=35 // pred_region
        %s299 = smul.u32 6, %s15
      $region40: #{mink_res_block.7} parent=35 // pred_fallthru
        _
    $region36: #{mink_res_block.7} parent=5 // pred_fallthru
      _
    %p300 = scmp.le.s32.totalorder 2, %s10
    // Predicated region
    $region41: #{mink_res_block.7} parent=5 // pred_check
      %p301 = pneg %p300
    $region42: #{mink_res_block.7} parent=5 // pred_check_branch
      %303 = sbr.rel (%p301) target = $region44
    $region43: #{mink_res_block.7} parent=5 // pred_region
      %s304 = ssub.s32 %s10, 2
      // Predicated region
      $region45: #{mink_res_block.7} parent=43 // pred_check
        %p305 = pneg %p133
      $region46: #{mink_res_block.7} parent=43 // pred_check_branch
        %307 = sbr.rel (%p305) target = $region48
      $region47: #{mink_res_block.7} parent=43 // pred_region
        %s308 = smul.u32 6, %s16
        %p309 = scmp.lt.s32.totalorder %s308, 23
        %s310 = scalar_select %p309, %s308, 23
        %s311 = smul.addr %s310, 8
        %s312 = scalar_lea.vmem %s4, %s311
      $region48: #{mink_res_block.7} parent=43 // pred_fallthru
        _
    $region44: #{mink_res_block.7} parent=5 // pred_fallthru
      _
  $region6: #{mink_res_block.7} parent=0 // loop_footer
    %s14 = sadd.s32 1, %s10
  $region7: #{mink_res_block.7} parent=0 // loop_footer_branch
    %9 = sbr.rel target = $region3
  $region8: #{mink_res_block.7} parent=0 // loop_exit
    _

</llo_original>
